<compile_context>
chip_gen: v5e
topology: v5e:2x2
jax: 0.10.0
libtpu: 0.0.40
codegen_flags: <defaults>
</compile_context>

<pallas_src>
import functools
import math

import jax
import jax.numpy as jnp
from jax import lax
from jax.experimental import pallas as pl
from jax.experimental.pallas import tpu as pltpu

DTYPE = jnp.bfloat16            # storage / MXU-operand dtype (f32 accumulation in-kernel)
VMEM_LIMIT = 32 * 1024 * 1024   # right-sized scoped-VMEM budget (fits v7x 64 MiB VMEM)
TILE_M = 512                    # row tile for dense/LN/FFN kernels (clamped to M)


# ----------------------------- Pallas kernels ------------------------------

def _dense_kernel(x_ref, w_ref, b_ref, o_ref, *, act):
    """o = act(x @ w + b); bf16 MXU operands, f32 accumulation + epilogue.

    Weight / bias blocks are full (K, N) / (1, N) with constant index_maps, so
    they stay resident in VMEM across all row tiles.
    """
    y = jnp.dot(x_ref[...], w_ref[...], preferred_element_type=jnp.float32)
    y = y + b_ref[...].astype(jnp.float32)
    if act == "gelu":            # exact (erf) GELU, matching BERT
        y = 0.5 * y * (1.0 + lax.erf(y * (1.0 / math.sqrt(2.0))))
    elif act == "tanh":
        y = jnp.tanh(y)
    o_ref[...] = y.astype(o_ref.dtype)


def _dense_add_ln_kernel(x_ref, w_ref, b_ref, r_ref, g_ref, be_ref, o_ref, *, eps):
    """o = LayerNorm(x @ w + b + residual) fused (f32 statistics), weights resident."""
    y = jnp.dot(x_ref[...], w_ref[...], preferred_element_type=jnp.float32)
    y = y + b_ref[...].astype(jnp.float32) + r_ref[...].astype(jnp.float32)
    mean = jnp.mean(y, axis=-1, keepdims=True)
    var = jnp.mean((y - mean) ** 2, axis=-1, keepdims=True)
    y = (y - mean) * lax.rsqrt(var + eps)
    y = y * g_ref[...].astype(jnp.float32) + be_ref[...].astype(jnp.float32)
    o_ref[...] = y.astype(o_ref.dtype)


def _ffn_kernel(x_ref, w1_ref, b1_ref, w2_ref, b2_ref, g_ref, be_ref, o_ref, *, eps):
    """Fused FFN: o = LayerNorm(GELU(x@W1+b1) @ W2 + b2 + x).

    W1/W2 resident in VMEM; the (tm, I) GELU intermediate lives in VMEM/vregs
    only (never written to HBM).
    """
    x = x_ref[...]
    h = jnp.dot(x, w1_ref[...], preferred_element_type=jnp.float32)
    h = h + b1_ref[...].astype(jnp.float32)
    h = 0.5 * h * (1.0 + lax.erf(h * (1.0 / math.sqrt(2.0))))   # exact GELU (BERT)
    y = jnp.dot(h.astype(w2_ref.dtype), w2_ref[...],
                preferred_element_type=jnp.float32)
    y = y + b2_ref[...].astype(jnp.float32) + x.astype(jnp.float32)
    mean = jnp.mean(y, axis=-1, keepdims=True)
    var = jnp.mean((y - mean) ** 2, axis=-1, keepdims=True)
    y = (y - mean) * lax.rsqrt(var + eps)
    y = y * g_ref[...].astype(jnp.float32) + be_ref[...].astype(jnp.float32)
    o_ref[...] = y.astype(o_ref.dtype)


def _layernorm_kernel(x_ref, g_ref, b_ref, o_ref, *, eps):
    x = x_ref[...].astype(jnp.float32)
    mean = jnp.mean(x, axis=-1, keepdims=True)
    var = jnp.mean((x - mean) ** 2, axis=-1, keepdims=True)
    y = (x - mean) * lax.rsqrt(var + eps)
    y = y * g_ref[...].astype(jnp.float32) + b_ref[...].astype(jnp.float32)
    o_ref[...] = y.astype(o_ref.dtype)


def _attention_kernel(qkv_ref, mb_ref, o_ref, *, nH, dH, H):
    """Self-attention for one batch element, heads split/merged in-kernel.

    qkv_ref : (1, S, 3H) bf16 — fused QKV activations (Q already pre-scaled)
    mb_ref  : (1, 1, S)  f32  — additive attention-mask bias
    o_ref   : (1, S, H)       — context, heads merged (lane-dense store)
    """
    qkv = qkv_ref[0]                      # (S, 3H) bf16, single tile load
    mb = mb_ref[0]                        # (1, S)  f32
    outs = []
    for h in range(nH):                   # static unroll over heads
        q = qkv[:, h * dH:(h + 1) * dH]               # (S, dH)
        k = qkv[:, H + h * dH:H + (h + 1) * dH]       # (S, dH)
        v = qkv[:, 2 * H + h * dH:2 * H + (h + 1) * dH]
        # QK^T: contraction over the last dim of both operands (no host-side
        # transpose of K); 1/sqrt(dH) is already folded into Q.
        s = jnp.einsum("qd,kd->qk", q, k, preferred_element_type=jnp.float32)
        s = s + mb                                     # broadcast over queries
        s = s - jnp.max(s, axis=-1, keepdims=True)
        p = jnp.exp(s)
        p = p * pl.reciprocal(jnp.sum(p, axis=-1, keepdims=True), approx=True)
        outs.append(jnp.dot(p.astype(v.dtype), v,
                            preferred_element_type=jnp.float32))
    o_ref[0] = jnp.concatenate(outs, axis=-1).astype(o_ref.dtype)


def _pooler_head_kernel(x_ref, pw_ref, pb_ref, fw_ref, fb_ref, o_ref):
    """logits = tanh(cls @ pool_w + pool_b) @ fc_w + fc_b (fused pooler + head)."""
    pooled = jnp.tanh(jnp.dot(x_ref[...], pw_ref[...],
                              preferred_element_type=jnp.float32)
                      + pb_ref[...].astype(jnp.float32))
    logits = jnp.dot(pooled.astype(fw_ref.dtype), fw_ref[...],
                     preferred_element_type=jnp.float32)
    logits = logits + fb_ref[...].astype(jnp.float32)
    o_ref[...] = logits.astype(o_ref.dtype)


# ----------------------------- Pallas wrappers ------------------------------

def pallas_dense(x, w, b, act=None):
    M, K = x.shape
    N = w.shape[1]
    tm = min(TILE_M, M)
    grid = (pl.cdiv(M, tm),)
    return pl.pallas_call(
        functools.partial(_dense_kernel, act=act),
        out_shape=jax.ShapeDtypeStruct((M, N), x.dtype),
        grid=grid,
        in_specs=[pl.BlockSpec((tm, K), lambda i: (i, 0)),
                  pl.BlockSpec((K, N), lambda i: (0, 0)),    # weight resident
                  pl.BlockSpec((1, N), lambda i: (0, 0))],   # bias resident
        out_specs=pl.BlockSpec((tm, N), lambda i: (i, 0)),
        compiler_params=pltpu.CompilerParams(
            dimension_semantics=("parallel",),
            vmem_limit_bytes=VMEM_LIMIT),
    )(x, w, b.reshape(1, N))


def pallas_dense_add_ln(x, w, b, residual, gamma, beta, eps=1e-12):
    M, K = x.shape
    N = w.shape[1]                       # LN normalizes over full N -> N untiled
    tm = min(TILE_M, M)
    grid = (pl.cdiv(M, tm),)
    return pl.pallas_call(
        functools.partial(_dense_add_ln_kernel, eps=eps),
        out_shape=jax.ShapeDtypeStruct((M, N), x.dtype),
        grid=grid,
        in_specs=[pl.BlockSpec((tm, K), lambda i: (i, 0)),
                  pl.BlockSpec((K, N), lambda i: (0, 0)),
                  pl.BlockSpec((1, N), lambda i: (0, 0)),
                  pl.BlockSpec((tm, N), lambda i: (i, 0)),
                  pl.BlockSpec((1, N), lambda i: (0, 0)),
                  pl.BlockSpec((1, N), lambda i: (0, 0))],
        out_specs=pl.BlockSpec((tm, N), lambda i: (i, 0)),
        compiler_params=pltpu.CompilerParams(
            dimension_semantics=("parallel",),
            vmem_limit_bytes=VMEM_LIMIT),
    )(x, w, b.reshape(1, N), residual, gamma.reshape(1, N), beta.reshape(1, N))


def pallas_ffn(x, w1, b1, w2, b2, gamma, beta, eps=1e-12):
    M, H = x.shape
    I = w1.shape[1]
    tm = min(TILE_M, M)
    grid = (pl.cdiv(M, tm),)
    return pl.pallas_call(
        functools.partial(_ffn_kernel, eps=eps),
        out_shape=jax.ShapeDtypeStruct((M, H), x.dtype),
        grid=grid,
        in_specs=[pl.BlockSpec((tm, H), lambda i: (i, 0)),
                  pl.BlockSpec((H, I), lambda i: (0, 0)),    # W1 resident
                  pl.BlockSpec((1, I), lambda i: (0, 0)),
                  pl.BlockSpec((I, H), lambda i: (0, 0)),    # W2 resident
                  pl.BlockSpec((1, H), lambda i: (0, 0)),
                  pl.BlockSpec((1, H), lambda i: (0, 0)),
                  pl.BlockSpec((1, H), lambda i: (0, 0))],
        out_specs=pl.BlockSpec((tm, H), lambda i: (i, 0)),
        compiler_params=pltpu.CompilerParams(
            dimension_semantics=("parallel",),
            vmem_limit_bytes=VMEM_LIMIT),
    )(x, w1, b1.reshape(1, I), w2, b2.reshape(1, H),
      gamma.reshape(1, H), beta.reshape(1, H))


def pallas_layernorm(x, gamma, beta, eps=1e-12):
    M, H = x.shape
    tm = min(TILE_M, M)
    grid = (pl.cdiv(M, tm),)
    return pl.pallas_call(
        functools.partial(_layernorm_kernel, eps=eps),
        out_shape=jax.ShapeDtypeStruct((M, H), x.dtype),
        grid=grid,
        in_specs=[pl.BlockSpec((tm, H), lambda i: (i, 0)),
                  pl.BlockSpec((1, H), lambda i: (0, 0)),
                  pl.BlockSpec((1, H), lambda i: (0, 0))],
        out_specs=pl.BlockSpec((tm, H), lambda i: (i, 0)),
        compiler_params=pltpu.CompilerParams(
            dimension_semantics=("parallel",),
            vmem_limit_bytes=VMEM_LIMIT),
    )(x, gamma.reshape(1, H), beta.reshape(1, H))


def pallas_attention(qkv3, mask_bias, nH, dH):
    """qkv3: (B, S, 3H) fused-QKV activations; returns (B, S, H) context."""
    B, S, threeH = qkv3.shape
    H = threeH // 3
    grid = (B,)
    # TODO(synk): for heavily padded real inputs, tile the key dimension and use
    # PrefetchScalarGridSpec per-example lengths to skip fully-masked KV blocks.
    return pl.pallas_call(
        functools.partial(_attention_kernel, nH=nH, dH=dH, H=H),
        out_shape=jax.ShapeDtypeStruct((B, S, H), qkv3.dtype),
        grid=grid,
        in_specs=[pl.BlockSpec((1, S, threeH), lambda b: (b, 0, 0)),
                  pl.BlockSpec((1, 1, S), lambda b: (b, 0, 0))],
        out_specs=pl.BlockSpec((1, S, H), lambda b: (b, 0, 0)),
        compiler_params=pltpu.CompilerParams(
            dimension_semantics=("parallel",),
            vmem_limit_bytes=VMEM_LIMIT),
    )(qkv3, mask_bias)


def pallas_pooler_head(cls_tok, pool_w, pool_b, fc_w, fc_b):
    B, H = cls_tok.shape
    L = fc_w.shape[1]
    return pl.pallas_call(
        _pooler_head_kernel,
        out_shape=jax.ShapeDtypeStruct((B, L), jnp.float32),
        grid=(1,),
        in_specs=[pl.BlockSpec((B, H), lambda i: (0, 0)),
                  pl.BlockSpec((H, H), lambda i: (0, 0)),
                  pl.BlockSpec((1, H), lambda i: (0, 0)),
                  pl.BlockSpec((H, L), lambda i: (0, 0)),
                  pl.BlockSpec((1, L), lambda i: (0, 0))],
        out_specs=pl.BlockSpec((B, L), lambda i: (0, 0)),
        compiler_params=pltpu.CompilerParams(
            dimension_semantics=("arbitrary",),
            vmem_limit_bytes=VMEM_LIMIT),
    )(cls_tok, pool_w, pool_b.reshape(1, H), fc_w, fc_b.reshape(1, L))


# ----------------------------- Model definition -----------------------------

CFG = dict(
    vocab_size=128,
    hidden=32,           # stands in for 768
    num_layers=2,        # stands in for 12
    num_heads=4,
    intermediate=64,     # stands in for 3072
    max_pos=16,
    type_vocab=2,
    num_labels=6,
)


def init_params(key, cfg):
    std = 0.02

    def nrm(key, shape):
        return std * jax.random.normal(key, shape, dtype=jnp.float32)

    H, I = cfg["hidden"], cfg["intermediate"]
    dH = H // cfg["num_heads"]
    scale = 1.0 / math.sqrt(dH)
    keys = iter(jax.random.split(key, 8 + 12 * cfg["num_layers"]))

    p = {
        "word_emb": nrm(next(keys), (cfg["vocab_size"], H)).astype(DTYPE),
        "pos_emb": nrm(next(keys), (cfg["max_pos"], H)).astype(DTYPE),
        "type_emb": nrm(next(keys), (cfg["type_vocab"], H)).astype(DTYPE),
        "emb_ln_g": jnp.ones((H,), jnp.float32),
        "emb_ln_b": jnp.zeros((H,), jnp.float32),
        "layers": [],
        "pool_w": nrm(next(keys), (H, H)).astype(DTYPE),
        "pool_b": jnp.zeros((H,), jnp.float32),
        "fc_w": nrm(next(keys), (H, cfg["num_labels"])).astype(DTYPE),
        "fc_b": jnp.zeros((cfg["num_labels"],), jnp.float32),
    }
    for _ in range(cfg["num_layers"]):
        q_w = nrm(next(keys), (H, H))
        k_w = nrm(next(keys), (H, H))
        v_w = nrm(next(keys), (H, H))
        q_b = jnp.zeros((H,), jnp.float32)
        k_b = jnp.zeros((H,), jnp.float32)
        v_b = jnp.zeros((H,), jnp.float32)
        # Fused QKV weight; fold the 1/sqrt(dH) attention scale into Q (exact).
        qkv_w = jnp.concatenate([q_w * scale, k_w, v_w], axis=1).astype(DTYPE)
        qkv_b = jnp.concatenate([q_b * scale, k_b, v_b], axis=0)
        p["layers"].append({
            "qkv_w": qkv_w, "qkv_b": qkv_b,
            "ao_w": nrm(next(keys), (H, H)).astype(DTYPE),
            "ao_b": jnp.zeros((H,), jnp.float32),
            "ln1_g": jnp.ones((H,), jnp.float32), "ln1_b": jnp.zeros((H,), jnp.float32),
            "ff1_w": nrm(next(keys), (H, I)).astype(DTYPE),
            "ff1_b": jnp.zeros((I,), jnp.float32),
            "ff2_w": nrm(next(keys), (I, H)).astype(DTYPE),
            "ff2_b": jnp.zeros((H,), jnp.float32),
            "ln2_g": jnp.ones((H,), jnp.float32), "ln2_b": jnp.zeros((H,), jnp.float32),
        })
    return p


def classifier_forward(params, ids, mask, token_type_ids, cfg=CFG):
    B, S = ids.shape
    H = cfg["hidden"]
    nH = cfg["num_heads"]
    dH = H // nH

    # ---- embeddings (LN is a Pallas kernel) ----
    # TODO(synk): data-dependent embedding-table gathers stay in plain JAX.
    positions = jnp.arange(S, dtype=jnp.int32)
    emb = (jnp.take(params["word_emb"], ids, axis=0)
           + jnp.take(params["pos_emb"], positions, axis=0)[None, :, :]
           + jnp.take(params["type_emb"], token_type_ids, axis=0))
    h2d = pallas_layernorm(emb.reshape(B * S, H),
                           params["emb_ln_g"], params["emb_ln_b"])

    # additive attention mask bias: (B, 1, S), f32
    mask_bias = ((1.0 - mask.astype(jnp.float32)) * -10000.0)[:, None, :]

    for lyr in params["layers"]:
        # fused QKV projection: one matmul, weights resident, h2d read once
        qkv = pallas_dense(h2d, lyr["qkv_w"], lyr["qkv_b"])          # (B*S, 3H)
        # free metadata reshape (no transpose / HBM relayout)
        qkv3 = qkv.reshape(B, S, 3 * H)
        # attention with in-kernel head split/merge; context comes back merged
        ctx = pallas_attention(qkv3, mask_bias, nH, dH)              # (B, S, H)
        ctx2d = ctx.reshape(B * S, H)
        # attention output proj + residual + LayerNorm, fused
        h2d = pallas_dense_add_ln(ctx2d, lyr["ao_w"], lyr["ao_b"],
                                  h2d, lyr["ln1_g"], lyr["ln1_b"])
        # fully fused FFN: GELU intermediate never hits HBM
        h2d = pallas_ffn(h2d, lyr["ff1_w"], lyr["ff1_b"],
                         lyr["ff2_w"], lyr["ff2_b"],
                         lyr["ln2_g"], lyr["ln2_b"])

    # ---- fused pooler (tanh on CLS token) + Linear(H, 6) head ----
    cls_tok = h2d.reshape(B, S, H)[:, 0, :]
    logits = pallas_pooler_head(cls_tok, params["pool_w"], params["pool_b"],
                                params["fc_w"], params["fc_b"])
    return logits


# ----------------------------------- Main -----------------------------------

if __name__ == "__main__":
    key = jax.random.PRNGKey(0)
    k_param, k_ids, k_type = jax.random.split(key, 3)

    B, S = 2, 8
    params = init_params(k_param, CFG)

    ids = jax.random.randint(k_ids, (B, S), 0, CFG["vocab_size"], dtype=jnp.int32)
    mask = jnp.ones((B, S), dtype=jnp.int32).at[1, 6:].set(0)   # ragged mask
    token_type_ids = jax.random.randint(k_type, (B, S), 0, CFG["type_vocab"],
                                        dtype=jnp.int32)

    fwd = jax.jit(functools.partial(classifier_forward, cfg=CFG))
    logits = fwd(params, ids, mask, token_type_ids)
    jax.block_until_ready(logits)
    assert logits.shape == (B, CFG["num_labels"])
    print("KERNEL_OK")
</pallas_src>

<mosaic_0001>
module attributes {stable_mosaic.version = 11 : i64} {
  func.func @_dense_kernel(%arg0: i32, %arg1: memref<16x32xbf16, #tpu.memory_space<vmem>>, %arg2: memref<32x96xbf16, #tpu.memory_space<vmem>>, %arg3: memref<1x96xf32, #tpu.memory_space<vmem>>, %arg4: memref<16x96xbf16, #tpu.memory_space<vmem>>) attributes {dimension_semantics = [#tpu.dimension_semantics<parallel>], iteration_bounds = array<i64: 1>, scalar_prefetch = 0 : i64, scratch_operands = 0 : i64, tpu.core_type = #tpu.core_type<tc>, window_params = [{transform_indices = @transform_0, window_bounds = array<i64: 16, 32>}, {pipeline_mode = #tpu.pipeline_mode<synchronous>, transform_indices = @transform_1, window_bounds = array<i64: 32, 96>}, {pipeline_mode = #tpu.pipeline_mode<synchronous>, transform_indices = @transform_2, window_bounds = array<i64: 1, 96>}, {transform_indices = @transform_3, window_bounds = array<i64: 16, 96>}]} {
    %c0 = arith.constant 0 : index
    %c0_0 = arith.constant 0 : index
    %0 = vector.load %arg1[%c0, %c0_0] : memref<16x32xbf16, #tpu.memory_space<vmem>>, vector<16x32xbf16>
    %c0_1 = arith.constant 0 : index
    %c0_2 = arith.constant 0 : index
    %1 = vector.load %arg2[%c0_1, %c0_2] : memref<32x96xbf16, #tpu.memory_space<vmem>>, vector<32x96xbf16>
    %cst = arith.constant dense<0.000000e+00> : vector<16x96xf32>
    %2 = tpu.matmul %0, %1, %cst {dimension_numbers = #tpu.dot_dimension_numbers<[1], [0], [0], [1], [0, 0, 1, 1], [], []>} : vector<16x32xbf16>, vector<32x96xbf16>, vector<16x96xf32> -> vector<16x96xf32>
    %c0_3 = arith.constant 0 : index
    %c0_4 = arith.constant 0 : index
    %3 = vector.load %arg3[%c0_3, %c0_4] : memref<1x96xf32, #tpu.memory_space<vmem>>, vector<1x96xf32>
    %4 = vector.broadcast %3 : vector<1x96xf32> to vector<16x96xf32>
    %5 = arith.addf %2, %4 : vector<16x96xf32>
    %6 = arith.truncf %5 : vector<16x96xf32> to vector<16x96xbf16>
    %c0_5 = arith.constant 0 : index
    %c0_6 = arith.constant 0 : index
    %7 = vector.load %arg4[%c0_5, %c0_6] : memref<16x96xbf16, #tpu.memory_space<vmem>>, vector<16x96xbf16>
    tpu.vector_store %arg4[%c0_5, %c0_6], %6 {strides = array<i32>} : memref<16x96xbf16, #tpu.memory_space<vmem>>, vector<16x96xbf16>,
    return
  }
  func.func @transform_0(%arg0: i32) -> (i32, i32) {
    %c0_i32 = arith.constant 0 : i32
    %c0_i32_0 = arith.constant 0 : i32
    return %arg0, %c0_i32 : i32, i32
  }
  func.func @transform_1(%arg0: i32) -> (i32, i32) {
    %c0_i32 = arith.constant 0 : i32
    %c0_i32_0 = arith.constant 0 : i32
    %c0_i32_1 = arith.constant 0 : i32
    return %c0_i32, %c0_i32_0 : i32, i32
  }
  func.func @transform_2(%arg0: i32) -> (i32, i32) {
    %c0_i32 = arith.constant 0 : i32
    %c0_i32_0 = arith.constant 0 : i32
    %c0_i32_1 = arith.constant 0 : i32
    return %c0_i32, %c0_i32_0 : i32, i32
  }
  func.func @transform_3(%arg0: i32) -> (i32, i32) {
    %c0_i32 = arith.constant 0 : i32
    %c0_i32_0 = arith.constant 0 : i32
    return %arg0, %c0_i32 : i32, i32
  }
}

module attributes {stable_mosaic.version = 11 : i64} {
  func.func @_layernorm_kernel(%arg0: i32, %arg1: memref<16x32xbf16, #tpu.memory_space<vmem>>, %arg2: memref<1x32xf32, #tpu.memory_space<vmem>>, %arg3: memref<1x32xf32, #tpu.memory_space<vmem>>, %arg4: memref<16x32xbf16, #tpu.memory_space<vmem>>) attributes {dimension_semantics = [#tpu.dimension_semantics<parallel>], iteration_bounds = array<i64: 1>, scalar_prefetch = 0 : i64, scratch_operands = 0 : i64, tpu.core_type = #tpu.core_type<tc>, window_params = [{transform_indices = @transform_0, window_bounds = array<i64: 16, 32>}, {pipeline_mode = #tpu.pipeline_mode<synchronous>, transform_indices = @transform_1, window_bounds = array<i64: 1, 32>}, {pipeline_mode = #tpu.pipeline_mode<synchronous>, transform_indices = @transform_2, window_bounds = array<i64: 1, 32>}, {transform_indices = @transform_3, window_bounds = array<i64: 16, 32>}]} {
    %c0 = arith.constant 0 : index
    %c0_0 = arith.constant 0 : index
    %0 = vector.load %arg1[%c0, %c0_0] : memref<16x32xbf16, #tpu.memory_space<vmem>>, vector<16x32xbf16>
    %1 = arith.extf %0 : vector<16x32xbf16> to vector<16x32xf32>
    %cst = arith.constant dense<0.000000e+00> : vector<16xf32>
    %2 = vector.multi_reduction <add>, %1, %cst [1] : vector<16x32xf32> to vector<16xf32>
    %3 = vector.shape_cast %2 : vector<16xf32> to vector<16x1xf32>
    %cst_1 = arith.constant 3.200000e+01 : f32
    %4 = vector.broadcast %cst_1 : f32 to vector<16x1xf32>
    %5 = arith.divf %3, %4 : vector<16x1xf32>
    %6 = vector.broadcast %5 : vector<16x1xf32> to vector<16x32xf32>
    %7 = arith.subf %1, %6 : vector<16x32xf32>
    %8 = arith.mulf %7, %7 : vector<16x32xf32>
    %cst_2 = arith.constant dense<0.000000e+00> : vector<16xf32>
    %9 = vector.multi_reduction <add>, %8, %cst_2 [1] : vector<16x32xf32> to vector<16xf32>
    %10 = vector.shape_cast %9 : vector<16xf32> to vector<16x1xf32>
    %cst_3 = arith.constant 3.200000e+01 : f32
    %11 = vector.broadcast %cst_3 : f32 to vector<16x1xf32>
    %12 = arith.divf %10, %11 : vector<16x1xf32>
    %13 = vector.broadcast %5 : vector<16x1xf32> to vector<16x32xf32>
    %14 = arith.subf %1, %13 : vector<16x32xf32>
    %cst_4 = arith.constant 9.99999996E-13 : f32
    %15 = vector.broadcast %cst_4 : f32 to vector<16x1xf32>
    %16 = arith.addf %12, %15 : vector<16x1xf32>
    %17 = math.rsqrt %16 : vector<16x1xf32>
    %18 = vector.broadcast %17 : vector<16x1xf32> to vector<16x32xf32>
    %19 = arith.mulf %14, %18 : vector<16x32xf32>
    %c0_5 = arith.constant 0 : index
    %c0_6 = arith.constant 0 : index
    %20 = vector.load %arg2[%c0_5, %c0_6] : memref<1x32xf32, #tpu.memory_space<vmem>>, vector<1x32xf32>
    %21 = vector.broadcast %20 : vector<1x32xf32> to vector<16x32xf32>
    %22 = arith.mulf %19, %21 : vector<16x32xf32>
    %c0_7 = arith.constant 0 : index
    %c0_8 = arith.constant 0 : index
    %23 = vector.load %arg3[%c0_7, %c0_8] : memref<1x32xf32, #tpu.memory_space<vmem>>, vector<1x32xf32>
    %24 = vector.broadcast %23 : vector<1x32xf32> to vector<16x32xf32>
    %25 = arith.addf %22, %24 : vector<16x32xf32>
    %26 = arith.truncf %25 : vector<16x32xf32> to vector<16x32xbf16>
    %c0_9 = arith.constant 0 : index
    %c0_10 = arith.constant 0 : index
    %27 = vector.load %arg4[%c0_9, %c0_10] : memref<16x32xbf16, #tpu.memory_space<vmem>>, vector<16x32xbf16>
    tpu.vector_store %arg4[%c0_9, %c0_10], %26 {strides = array<i32>} : memref<16x32xbf16, #tpu.memory_space<vmem>>, vector<16x32xbf16>,
    return
  }
  func.func @transform_0(%arg0: i32) -> (i32, i32) {
    %c0_i32 = arith.constant 0 : i32
    %c0_i32_0 = arith.constant 0 : i32
    return %arg0, %c0_i32 : i32, i32
  }
  func.func @transform_1(%arg0: i32) -> (i32, i32) {
    %c0_i32 = arith.constant 0 : i32
    %c0_i32_0 = arith.constant 0 : i32
    %c0_i32_1 = arith.constant 0 : i32
    return %c0_i32, %c0_i32_0 : i32, i32
  }
  func.func @transform_2(%arg0: i32) -> (i32, i32) {
    %c0_i32 = arith.constant 0 : i32
    %c0_i32_0 = arith.constant 0 : i32
    %c0_i32_1 = arith.constant 0 : i32
    return %c0_i32, %c0_i32_0 : i32, i32
  }
  func.func @transform_3(%arg0: i32) -> (i32, i32) {
    %c0_i32 = arith.constant 0 : i32
    %c0_i32_0 = arith.constant 0 : i32
    return %arg0, %c0_i32 : i32, i32
  }
}

module attributes {stable_mosaic.version = 11 : i64} {
  func.func @_dense_add_ln_kernel(%arg0: i32, %arg1: memref<16x32xbf16, #tpu.memory_space<vmem>>, %arg2: memref<32x32xbf16, #tpu.memory_space<vmem>>, %arg3: memref<1x32xf32, #tpu.memory_space<vmem>>, %arg4: memref<16x32xbf16, #tpu.memory_space<vmem>>, %arg5: memref<1x32xf32, #tpu.memory_space<vmem>>, %arg6: memref<1x32xf32, #tpu.memory_space<vmem>>, %arg7: memref<16x32xbf16, #tpu.memory_space<vmem>>) attributes {dimension_semantics = [#tpu.dimension_semantics<parallel>], iteration_bounds = array<i64: 1>, scalar_prefetch = 0 : i64, scratch_operands = 0 : i64, tpu.core_type = #tpu.core_type<tc>, window_params = [{transform_indices = @transform_0, window_bounds = array<i64: 16, 32>}, {pipeline_mode = #tpu.pipeline_mode<synchronous>, transform_indices = @transform_1, window_bounds = array<i64: 32, 32>}, {pipeline_mode = #tpu.pipeline_mode<synchronous>, transform_indices = @transform_2, window_bounds = array<i64: 1, 32>}, {transform_indices = @transform_3, window_bounds = array<i64: 16, 32>}, {pipeline_mode = #tpu.pipeline_mode<synchronous>, transform_indices = @transform_4, window_bounds = array<i64: 1, 32>}, {pipeline_mode = #tpu.pipeline_mode<synchronous>, transform_indices = @transform_5, window_bounds = array<i64: 1, 32>}, {transform_indices = @transform_6, window_bounds = array<i64: 16, 32>}]} {
    %c0 = arith.constant 0 : index
    %c0_0 = arith.constant 0 : index
    %0 = vector.load %arg1[%c0, %c0_0] : memref<16x32xbf16, #tpu.memory_space<vmem>>, vector<16x32xbf16>
    %c0_1 = arith.constant 0 : index
    %c0_2 = arith.constant 0 : index
    %1 = vector.load %arg2[%c0_1, %c0_2] : memref<32x32xbf16, #tpu.memory_space<vmem>>, vector<32x32xbf16>
    %cst = arith.constant dense<0.000000e+00> : vector<16x32xf32>
    %2 = tpu.matmul %0, %1, %cst {dimension_numbers = #tpu.dot_dimension_numbers<[1], [0], [0], [1], [0, 0, 1, 1], [], []>} : vector<16x32xbf16>, vector<32x32xbf16>, vector<16x32xf32> -> vector<16x32xf32>
    %c0_3 = arith.constant 0 : index
    %c0_4 = arith.constant 0 : index
    %3 = vector.load %arg3[%c0_3, %c0_4] : memref<1x32xf32, #tpu.memory_space<vmem>>, vector<1x32xf32>
    %4 = vector.broadcast %3 : vector<1x32xf32> to vector<16x32xf32>
    %5 = arith.addf %2, %4 : vector<16x32xf32>
    %c0_5 = arith.constant 0 : index
    %c0_6 = arith.constant 0 : index
    %6 = vector.load %arg4[%c0_5, %c0_6] : memref<16x32xbf16, #tpu.memory_space<vmem>>, vector<16x32xbf16>
    %7 = arith.extf %6 : vector<16x32xbf16> to vector<16x32xf32>
    %8 = arith.addf %5, %7 : vector<16x32xf32>
    %cst_7 = arith.constant dense<0.000000e+00> : vector<16xf32>
    %9 = vector.multi_reduction <add>, %8, %cst_7 [1] : vector<16x32xf32> to vector<16xf32>
    %10 = vector.shape_cast %9 : vector<16xf32> to vector<16x1xf32>
    %cst_8 = arith.constant 3.200000e+01 : f32
    %11 = vector.broadcast %cst_8 : f32 to vector<16x1xf32>
    %12 = arith.divf %10, %11 : vector<16x1xf32>
    %13 = vector.broadcast %12 : vector<16x1xf32> to vector<16x32xf32>
    %14 = arith.subf %8, %13 : vector<16x32xf32>
    %15 = arith.mulf %14, %14 : vector<16x32xf32>
    %cst_9 = arith.constant dense<0.000000e+00> : vector<16xf32>
    %16 = vector.multi_reduction <add>, %15, %cst_9 [1] : vector<16x32xf32> to vector<16xf32>
    %17 = vector.shape_cast %16 : vector<16xf32> to vector<16x1xf32>
    %cst_10 = arith.constant 3.200000e+01 : f32
    %18 = vector.broadcast %cst_10 : f32 to vector<16x1xf32>
    %19 = arith.divf %17, %18 : vector<16x1xf32>
    %20 = vector.broadcast %12 : vector<16x1xf32> to vector<16x32xf32>
    %21 = arith.subf %8, %20 : vector<16x32xf32>
    %cst_11 = arith.constant 9.99999996E-13 : f32
    %22 = vector.broadcast %cst_11 : f32 to vector<16x1xf32>
    %23 = arith.addf %19, %22 : vector<16x1xf32>
    %24 = math.rsqrt %23 : vector<16x1xf32>
    %25 = vector.broadcast %24 : vector<16x1xf32> to vector<16x32xf32>
    %26 = arith.mulf %21, %25 : vector<16x32xf32>
    %c0_12 = arith.constant 0 : index
    %c0_13 = arith.constant 0 : index
    %27 = vector.load %arg5[%c0_12, %c0_13] : memref<1x32xf32, #tpu.memory_space<vmem>>, vector<1x32xf32>
    %28 = vector.broadcast %27 : vector<1x32xf32> to vector<16x32xf32>
    %29 = arith.mulf %26, %28 : vector<16x32xf32>
    %c0_14 = arith.constant 0 : index
    %c0_15 = arith.constant 0 : index
    %30 = vector.load %arg6[%c0_14, %c0_15] : memref<1x32xf32, #tpu.memory_space<vmem>>, vector<1x32xf32>
    %31 = vector.broadcast %30 : vector<1x32xf32> to vector<16x32xf32>
    %32 = arith.addf %29, %31 : vector<16x32xf32>
    %33 = arith.truncf %32 : vector<16x32xf32> to vector<16x32xbf16>
    %c0_16 = arith.constant 0 : index
    %c0_17 = arith.constant 0 : index
    %34 = vector.load %arg7[%c0_16, %c0_17] : memref<16x32xbf16, #tpu.memory_space<vmem>>, vector<16x32xbf16>
    tpu.vector_store %arg7[%c0_16, %c0_17], %33 {strides = array<i32>} : memref<16x32xbf16, #tpu.memory_space<vmem>>, vector<16x32xbf16>,
    return
  }
  func.func @transform_0(%arg0: i32) -> (i32, i32) {
    %c0_i32 = arith.constant 0 : i32
    %c0_i32_0 = arith.constant 0 : i32
    return %arg0, %c0_i32 : i32, i32
  }
  func.func @transform_1(%arg0: i32) -> (i32, i32) {
    %c0_i32 = arith.constant 0 : i32
    %c0_i32_0 = arith.constant 0 : i32
    %c0_i32_1 = arith.constant 0 : i32
    return %c0_i32, %c0_i32_0 : i32, i32
  }
  func.func @transform_2(%arg0: i32) -> (i32, i32) {
    %c0_i32 = arith.constant 0 : i32
    %c0_i32_0 = arith.constant 0 : i32
    %c0_i32_1 = arith.constant 0 : i32
    return %c0_i32, %c0_i32_0 : i32, i32
  }
  func.func @transform_3(%arg0: i32) -> (i32, i32) {
    %c0_i32 = arith.constant 0 : i32
    %c0_i32_0 = arith.constant 0 : i32
    return %arg0, %c0_i32 : i32, i32
  }
  func.func @transform_4(%arg0: i32) -> (i32, i32) {
    %c0_i32 = arith.constant 0 : i32
    %c0_i32_0 = arith.constant 0 : i32
    %c0_i32_1 = arith.constant 0 : i32
    return %c0_i32, %c0_i32_0 : i32, i32
  }
  func.func @transform_5(%arg0: i32) -> (i32, i32) {
    %c0_i32 = arith.constant 0 : i32
    %c0_i32_0 = arith.constant 0 : i32
    %c0_i32_1 = arith.constant 0 : i32
    return %c0_i32, %c0_i32_0 : i32, i32
  }
  func.func @transform_6(%arg0: i32) -> (i32, i32) {
    %c0_i32 = arith.constant 0 : i32
    %c0_i32_0 = arith.constant 0 : i32
    return %arg0, %c0_i32 : i32, i32
  }
}

module attributes {stable_mosaic.version = 11 : i64} {
  func.func @_attention_kernel(%arg0: i32, %arg1: memref<1x8x96xbf16, #tpu.memory_space<vmem>>, %arg2: memref<1x1x8xf32, #tpu.memory_space<vmem>>, %arg3: memref<1x8x32xbf16, #tpu.memory_space<vmem>>) attributes {dimension_semantics = [#tpu.dimension_semantics<parallel>], iteration_bounds = array<i64: 2>, scalar_prefetch = 0 : i64, scratch_operands = 0 : i64, tpu.core_type = #tpu.core_type<tc>, window_params = [{transform_indices = @transform_0, window_bounds = array<i64: 1, 8, 96>}, {transform_indices = @transform_1, window_bounds = array<i64: 1, 1, 8>}, {transform_indices = @transform_2, window_bounds = array<i64: 1, 8, 32>}]} {
    %c0 = arith.constant 0 : index
    %c0_0 = arith.constant 0 : index
    %c0_1 = arith.constant 0 : index
    %0 = vector.load %arg1[%c0, %c0_0, %c0_1] : memref<1x8x96xbf16, #tpu.memory_space<vmem>>, vector<1x8x96xbf16>
    %1 = vector.shape_cast %0 : vector<1x8x96xbf16> to vector<8x96xbf16>
    %c0_2 = arith.constant 0 : index
    %c0_3 = arith.constant 0 : index
    %c0_4 = arith.constant 0 : index
    %2 = vector.load %arg2[%c0_2, %c0_3, %c0_4] : memref<1x1x8xf32, #tpu.memory_space<vmem>>, vector<1x1x8xf32>
    %3 = vector.shape_cast %2 : vector<1x1x8xf32> to vector<1x8xf32>
    %4 = vector.extract_strided_slice %1 {offsets = [0, 0], sizes = [8, 8], strides = [1, 1]} : vector<8x96xbf16> to vector<8x8xbf16>
    %5 = vector.extract_strided_slice %1 {offsets = [0, 32], sizes = [8, 8], strides = [1, 1]} : vector<8x96xbf16> to vector<8x8xbf16>
    %6 = vector.extract_strided_slice %1 {offsets = [0, 64], sizes = [8, 8], strides = [1, 1]} : vector<8x96xbf16> to vector<8x8xbf16>
    "tpu.trace_start"() <{level = 10 : i32, message = "qd,kd->qk"}> : () -> ()
    %cst = arith.constant dense<0.000000e+00> : vector<8x8xf32>
    %7 = tpu.matmul %4, %5, %cst {dimension_numbers = #tpu.dot_dimension_numbers<[1], [1], [0], [0], [0, 0, 1, 0], [], []>} : vector<8x8xbf16>, vector<8x8xbf16>, vector<8x8xf32> -> vector<8x8xf32>
    "tpu.trace_stop"() : () -> ()
    %8 = vector.broadcast %3 : vector<1x8xf32> to vector<8x8xf32>
    %9 = arith.addf %7, %8 : vector<8x8xf32>
    %cst_5 = arith.constant dense<0xFF800000> : vector<8xf32>
    %10 = vector.multi_reduction <maximumf>, %9, %cst_5 [1] : vector<8x8xf32> to vector<8xf32>
    %11 = vector.shape_cast %10 : vector<8xf32> to vector<8x1xf32>
    %12 = vector.broadcast %11 : vector<8x1xf32> to vector<8x8xf32>
    %13 = arith.subf %9, %12 : vector<8x8xf32>
    %14 = math.exp %13 : vector<8x8xf32>
    %cst_6 = arith.constant dense<0.000000e+00> : vector<8xf32>
    %15 = vector.multi_reduction <add>, %14, %cst_6 [1] : vector<8x8xf32> to vector<8xf32>
    %16 = vector.shape_cast %15 : vector<8xf32> to vector<8x1xf32>
    %17 = tpu.reciprocal %16 {approx = true} : vector<8x1xf32> -> vector<8x1xf32>
    %18 = vector.broadcast %17 : vector<8x1xf32> to vector<8x8xf32>
    %19 = arith.mulf %14, %18 : vector<8x8xf32>
    %20 = arith.truncf %19 : vector<8x8xf32> to vector<8x8xbf16>
    %cst_7 = arith.constant dense<0.000000e+00> : vector<8x8xf32>
    %21 = tpu.matmul %20, %6, %cst_7 {dimension_numbers = #tpu.dot_dimension_numbers<[1], [0], [0], [1], [0, 0, 1, 1], [], []>} : vector<8x8xbf16>, vector<8x8xbf16>, vector<8x8xf32> -> vector<8x8xf32>
    %22 = vector.extract_strided_slice %1 {offsets = [0, 8], sizes = [8, 8], strides = [1, 1]} : vector<8x96xbf16> to vector<8x8xbf16>
    %23 = vector.extract_strided_slice %1 {offsets = [0, 40], sizes = [8, 8], strides = [1, 1]} : vector<8x96xbf16> to vector<8x8xbf16>
    %24 = vector.extract_strided_slice %1 {offsets = [0, 72], sizes = [8, 8], strides = [1, 1]} : vector<8x96xbf16> to vector<8x8xbf16>
    "tpu.trace_start"() <{level = 10 : i32, message = "qd,kd->qk"}> : () -> ()
    %cst_8 = arith.constant dense<0.000000e+00> : vector<8x8xf32>
    %25 = tpu.matmul %22, %23, %cst_8 {dimension_numbers = #tpu.dot_dimension_numbers<[1], [1], [0], [0], [0, 0, 1, 0], [], []>} : vector<8x8xbf16>, vector<8x8xbf16>, vector<8x8xf32> -> vector<8x8xf32>
    "tpu.trace_stop"() : () -> ()
    %26 = vector.broadcast %3 : vector<1x8xf32> to vector<8x8xf32>
    %27 = arith.addf %25, %26 : vector<8x8xf32>
    %cst_9 = arith.constant dense<0xFF800000> : vector<8xf32>
    %28 = vector.multi_reduction <maximumf>, %27, %cst_9 [1] : vector<8x8xf32> to vector<8xf32>
    %29 = vector.shape_cast %28 : vector<8xf32> to vector<8x1xf32>
    %30 = vector.broadcast %29 : vector<8x1xf32> to vector<8x8xf32>
    %31 = arith.subf %27, %30 : vector<8x8xf32>
    %32 = math.exp %31 : vector<8x8xf32>
    %cst_10 = arith.constant dense<0.000000e+00> : vector<8xf32>
    %33 = vector.multi_reduction <add>, %32, %cst_10 [1] : vector<8x8xf32> to vector<8xf32>
    %34 = vector.shape_cast %33 : vector<8xf32> to vector<8x1xf32>
    %35 = tpu.reciprocal %34 {approx = true} : vector<8x1xf32> -> vector<8x1xf32>
    %36 = vector.broadcast %35 : vector<8x1xf32> to vector<8x8xf32>
    %37 = arith.mulf %32, %36 : vector<8x8xf32>
    %38 = arith.truncf %37 : vector<8x8xf32> to vector<8x8xbf16>
    %cst_11 = arith.constant dense<0.000000e+00> : vector<8x8xf32>
    %39 = tpu.matmul %38, %24, %cst_11 {dimension_numbers = #tpu.dot_dimension_numbers<[1], [0], [0], [1], [0, 0, 1, 1], [], []>} : vector<8x8xbf16>, vector<8x8xbf16>, vector<8x8xf32> -> vector<8x8xf32>
    %40 = vector.extract_strided_slice %1 {offsets = [0, 16], sizes = [8, 8], strides = [1, 1]} : vector<8x96xbf16> to vector<8x8xbf16>
    %41 = vector.extract_strided_slice %1 {offsets = [0, 48], sizes = [8, 8], strides = [1, 1]} : vector<8x96xbf16> to vector<8x8xbf16>
    %42 = vector.extract_strided_slice %1 {offsets = [0, 80], sizes = [8, 8], strides = [1, 1]} : vector<8x96xbf16> to vector<8x8xbf16>
    "tpu.trace_start"() <{level = 10 : i32, message = "qd,kd->qk"}> : () -> ()
    %cst_12 = arith.constant dense<0.000000e+00> : vector<8x8xf32>
    %43 = tpu.matmul %40, %41, %cst_12 {dimension_numbers = #tpu.dot_dimension_numbers<[1], [1], [0], [0], [0, 0, 1, 0], [], []>} : vector<8x8xbf16>, vector<8x8xbf16>, vector<8x8xf32> -> vector<8x8xf32>
    "tpu.trace_stop"() : () -> ()
    %44 = vector.broadcast %3 : vector<1x8xf32> to vector<8x8xf32>
    %45 = arith.addf %43, %44 : vector<8x8xf32>
    %cst_13 = arith.constant dense<0xFF800000> : vector<8xf32>
    %46 = vector.multi_reduction <maximumf>, %45, %cst_13 [1] : vector<8x8xf32> to vector<8xf32>
    %47 = vector.shape_cast %46 : vector<8xf32> to vector<8x1xf32>
    %48 = vector.broadcast %47 : vector<8x1xf32> to vector<8x8xf32>
    %49 = arith.subf %45, %48 : vector<8x8xf32>
    %50 = math.exp %49 : vector<8x8xf32>
    %cst_14 = arith.constant dense<0.000000e+00> : vector<8xf32>
    %51 = vector.multi_reduction <add>, %50, %cst_14 [1] : vector<8x8xf32> to vector<8xf32>
    %52 = vector.shape_cast %51 : vector<8xf32> to vector<8x1xf32>
    %53 = tpu.reciprocal %52 {approx = true} : vector<8x1xf32> -> vector<8x1xf32>
    %54 = vector.broadcast %53 : vector<8x1xf32> to vector<8x8xf32>
    %55 = arith.mulf %50, %54 : vector<8x8xf32>
    %56 = arith.truncf %55 : vector<8x8xf32> to vector<8x8xbf16>
    %cst_15 = arith.constant dense<0.000000e+00> : vector<8x8xf32>
    %57 = tpu.matmul %56, %42, %cst_15 {dimension_numbers = #tpu.dot_dimension_numbers<[1], [0], [0], [1], [0, 0, 1, 1], [], []>} : vector<8x8xbf16>, vector<8x8xbf16>, vector<8x8xf32> -> vector<8x8xf32>
    %58 = vector.extract_strided_slice %1 {offsets = [0, 24], sizes = [8, 8], strides = [1, 1]} : vector<8x96xbf16> to vector<8x8xbf16>
    %59 = vector.extract_strided_slice %1 {offsets = [0, 56], sizes = [8, 8], strides = [1, 1]} : vector<8x96xbf16> to vector<8x8xbf16>
    %60 = vector.extract_strided_slice %1 {offsets = [0, 88], sizes = [8, 8], strides = [1, 1]} : vector<8x96xbf16> to vector<8x8xbf16>
    "tpu.trace_start"() <{level = 10 : i32, message = "qd,kd->qk"}> : () -> ()
    %cst_16 = arith.constant dense<0.000000e+00> : vector<8x8xf32>
    %61 = tpu.matmul %58, %59, %cst_16 {dimension_numbers = #tpu.dot_dimension_numbers<[1], [1], [0], [0], [0, 0, 1, 0], [], []>} : vector<8x8xbf16>, vector<8x8xbf16>, vector<8x8xf32> -> vector<8x8xf32>
    "tpu.trace_stop"() : () -> ()
    %62 = vector.broadcast %3 : vector<1x8xf32> to vector<8x8xf32>
    %63 = arith.addf %61, %62 : vector<8x8xf32>
    %cst_17 = arith.constant dense<0xFF800000> : vector<8xf32>
    %64 = vector.multi_reduction <maximumf>, %63, %cst_17 [1] : vector<8x8xf32> to vector<8xf32>
    %65 = vector.shape_cast %64 : vector<8xf32> to vector<8x1xf32>
    %66 = vector.broadcast %65 : vector<8x1xf32> to vector<8x8xf32>
    %67 = arith.subf %63, %66 : vector<8x8xf32>
    %68 = math.exp %67 : vector<8x8xf32>
    %cst_18 = arith.constant dense<0.000000e+00> : vector<8xf32>
    %69 = vector.multi_reduction <add>, %68, %cst_18 [1] : vector<8x8xf32> to vector<8xf32>
    %70 = vector.shape_cast %69 : vector<8xf32> to vector<8x1xf32>
    %71 = tpu.reciprocal %70 {approx = true} : vector<8x1xf32> -> vector<8x1xf32>
    %72 = vector.broadcast %71 : vector<8x1xf32> to vector<8x8xf32>
    %73 = arith.mulf %68, %72 : vector<8x8xf32>
    %74 = arith.truncf %73 : vector<8x8xf32> to vector<8x8xbf16>
    %cst_19 = arith.constant dense<0.000000e+00> : vector<8x8xf32>
    %75 = tpu.matmul %74, %60, %cst_19 {dimension_numbers = #tpu.dot_dimension_numbers<[1], [0], [0], [1], [0, 0, 1, 1], [], []>} : vector<8x8xbf16>, vector<8x8xbf16>, vector<8x8xf32> -> vector<8x8xf32>
    %76 = tpu.concatenate %21, %39, %57, %75 in 1 : vector<8x8xf32>, vector<8x8xf32>, vector<8x8xf32>, vector<8x8xf32> -> vector<8x32xf32>
    %77 = arith.truncf %76 : vector<8x32xf32> to vector<8x32xbf16>
    %c0_20 = arith.constant 0 : index
    %c0_21 = arith.constant 0 : index
    %c0_22 = arith.constant 0 : index
    %78 = vector.load %arg3[%c0_20, %c0_21, %c0_22] : memref<1x8x32xbf16, #tpu.memory_space<vmem>>, vector<1x8x32xbf16>
    %79 = vector.shape_cast %78 : vector<1x8x32xbf16> to vector<8x32xbf16>
    %80 = vector.shape_cast %77 : vector<8x32xbf16> to vector<1x8x32xbf16>
    tpu.vector_store %arg3[%c0_20, %c0_21, %c0_22], %80 {strides = array<i32>} : memref<1x8x32xbf16, #tpu.memory_space<vmem>>, vector<1x8x32xbf16>,
    return
  }
  func.func @transform_0(%arg0: i32) -> (i32, i32, i32) {
    %c0_i32 = arith.constant 0 : i32
    %c0_i32_0 = arith.constant 0 : i32
    %c0_i32_1 = arith.constant 0 : i32
    return %arg0, %c0_i32, %c0_i32_0 : i32, i32, i32
  }
  func.func @transform_1(%arg0: i32) -> (i32, i32, i32) {
    %c0_i32 = arith.constant 0 : i32
    %c0_i32_0 = arith.constant 0 : i32
    %c0_i32_1 = arith.constant 0 : i32
    return %arg0, %c0_i32, %c0_i32_0 : i32, i32, i32
  }
  func.func @transform_2(%arg0: i32) -> (i32, i32, i32) {
    %c0_i32 = arith.constant 0 : i32
    %c0_i32_0 = arith.constant 0 : i32
    %c0_i32_1 = arith.constant 0 : i32
    return %arg0, %c0_i32, %c0_i32_0 : i32, i32, i32
  }
}

module attributes {stable_mosaic.version = 11 : i64} {
  func.func @_ffn_kernel(%arg0: i32, %arg1: memref<16x32xbf16, #tpu.memory_space<vmem>>, %arg2: memref<32x64xbf16, #tpu.memory_space<vmem>>, %arg3: memref<1x64xf32, #tpu.memory_space<vmem>>, %arg4: memref<64x32xbf16, #tpu.memory_space<vmem>>, %arg5: memref<1x32xf32, #tpu.memory_space<vmem>>, %arg6: memref<1x32xf32, #tpu.memory_space<vmem>>, %arg7: memref<1x32xf32, #tpu.memory_space<vmem>>, %arg8: memref<16x32xbf16, #tpu.memory_space<vmem>>) attributes {dimension_semantics = [#tpu.dimension_semantics<parallel>], iteration_bounds = array<i64: 1>, scalar_prefetch = 0 : i64, scratch_operands = 0 : i64, tpu.core_type = #tpu.core_type<tc>, window_params = [{transform_indices = @transform_0, window_bounds = array<i64: 16, 32>}, {pipeline_mode = #tpu.pipeline_mode<synchronous>, transform_indices = @transform_1, window_bounds = array<i64: 32, 64>}, {pipeline_mode = #tpu.pipeline_mode<synchronous>, transform_indices = @transform_2, window_bounds = array<i64: 1, 64>}, {pipeline_mode = #tpu.pipeline_mode<synchronous>, transform_indices = @transform_3, window_bounds = array<i64: 64, 32>}, {pipeline_mode = #tpu.pipeline_mode<synchronous>, transform_indices = @transform_4, window_bounds = array<i64: 1, 32>}, {pipeline_mode = #tpu.pipeline_mode<synchronous>, transform_indices = @transform_5, window_bounds = array<i64: 1, 32>}, {pipeline_mode = #tpu.pipeline_mode<synchronous>, transform_indices = @transform_6, window_bounds = array<i64: 1, 32>}, {transform_indices = @transform_7, window_bounds = array<i64: 16, 32>}]} {
    %c0 = arith.constant 0 : index
    %c0_0 = arith.constant 0 : index
    %0 = vector.load %arg1[%c0, %c0_0] : memref<16x32xbf16, #tpu.memory_space<vmem>>, vector<16x32xbf16>
    %c0_1 = arith.constant 0 : index
    %c0_2 = arith.constant 0 : index
    %1 = vector.load %arg2[%c0_1, %c0_2] : memref<32x64xbf16, #tpu.memory_space<vmem>>, vector<32x64xbf16>
    %cst = arith.constant dense<0.000000e+00> : vector<16x64xf32>
    %2 = tpu.matmul %0, %1, %cst {dimension_numbers = #tpu.dot_dimension_numbers<[1], [0], [0], [1], [0, 0, 1, 1], [], []>} : vector<16x32xbf16>, vector<32x64xbf16>, vector<16x64xf32> -> vector<16x64xf32>
    %c0_3 = arith.constant 0 : index
    %c0_4 = arith.constant 0 : index
    %3 = vector.load %arg3[%c0_3, %c0_4] : memref<1x64xf32, #tpu.memory_space<vmem>>, vector<1x64xf32>
    %4 = vector.broadcast %3 : vector<1x64xf32> to vector<16x64xf32>
    %5 = arith.addf %2, %4 : vector<16x64xf32>
    %cst_5 = arith.constant 5.000000e-01 : f32
    %6 = vector.broadcast %cst_5 : f32 to vector<16x64xf32>
    %7 = arith.mulf %6, %5 : vector<16x64xf32>
    %cst_6 = arith.constant 0.707106769 : f32
    %8 = vector.broadcast %cst_6 : f32 to vector<16x64xf32>
    %9 = arith.mulf %5, %8 : vector<16x64xf32>
    %10 = math.erf %9 : vector<16x64xf32>
    %cst_7 = arith.constant 1.000000e+00 : f32
    %11 = vector.broadcast %cst_7 : f32 to vector<16x64xf32>
    %12 = arith.addf %11, %10 : vector<16x64xf32>
    %13 = arith.mulf %7, %12 : vector<16x64xf32>
    %14 = arith.truncf %13 : vector<16x64xf32> to vector<16x64xbf16>
    %c0_8 = arith.constant 0 : index
    %c0_9 = arith.constant 0 : index
    %15 = vector.load %arg4[%c0_8, %c0_9] : memref<64x32xbf16, #tpu.memory_space<vmem>>, vector<64x32xbf16>
    %cst_10 = arith.constant dense<0.000000e+00> : vector<16x32xf32>
    %16 = tpu.matmul %14, %15, %cst_10 {dimension_numbers = #tpu.dot_dimension_numbers<[1], [0], [0], [1], [0, 0, 1, 1], [], []>} : vector<16x64xbf16>, vector<64x32xbf16>, vector<16x32xf32> -> vector<16x32xf32>
    %c0_11 = arith.constant 0 : index
    %c0_12 = arith.constant 0 : index
    %17 = vector.load %arg5[%c0_11, %c0_12] : memref<1x32xf32, #tpu.memory_space<vmem>>, vector<1x32xf32>
    %18 = vector.broadcast %17 : vector<1x32xf32> to vector<16x32xf32>
    %19 = arith.addf %16, %18 : vector<16x32xf32>
    %20 = arith.extf %0 : vector<16x32xbf16> to vector<16x32xf32>
    %21 = arith.addf %19, %20 : vector<16x32xf32>
    %cst_13 = arith.constant dense<0.000000e+00> : vector<16xf32>
    %22 = vector.multi_reduction <add>, %21, %cst_13 [1] : vector<16x32xf32> to vector<16xf32>
    %23 = vector.shape_cast %22 : vector<16xf32> to vector<16x1xf32>
    %cst_14 = arith.constant 3.200000e+01 : f32
    %24 = vector.broadcast %cst_14 : f32 to vector<16x1xf32>
    %25 = arith.divf %23, %24 : vector<16x1xf32>
    %26 = vector.broadcast %25 : vector<16x1xf32> to vector<16x32xf32>
    %27 = arith.subf %21, %26 : vector<16x32xf32>
    %28 = arith.mulf %27, %27 : vector<16x32xf32>
    %cst_15 = arith.constant dense<0.000000e+00> : vector<16xf32>
    %29 = vector.multi_reduction <add>, %28, %cst_15 [1] : vector<16x32xf32> to vector<16xf32>
    %30 = vector.shape_cast %29 : vector<16xf32> to vector<16x1xf32>
    %cst_16 = arith.constant 3.200000e+01 : f32
    %31 = vector.broadcast %cst_16 : f32 to vector<16x1xf32>
    %32 = arith.divf %30, %31 : vector<16x1xf32>
    %33 = vector.broadcast %25 : vector<16x1xf32> to vector<16x32xf32>
    %34 = arith.subf %21, %33 : vector<16x32xf32>
    %cst_17 = arith.constant 9.99999996E-13 : f32
    %35 = vector.broadcast %cst_17 : f32 to vector<16x1xf32>
    %36 = arith.addf %32, %35 : vector<16x1xf32>
    %37 = math.rsqrt %36 : vector<16x1xf32>
    %38 = vector.broadcast %37 : vector<16x1xf32> to vector<16x32xf32>
    %39 = arith.mulf %34, %38 : vector<16x32xf32>
    %c0_18 = arith.constant 0 : index
    %c0_19 = arith.constant 0 : index
    %40 = vector.load %arg6[%c0_18, %c0_19] : memref<1x32xf32, #tpu.memory_space<vmem>>, vector<1x32xf32>
    %41 = vector.broadcast %40 : vector<1x32xf32> to vector<16x32xf32>
    %42 = arith.mulf %39, %41 : vector<16x32xf32>
    %c0_20 = arith.constant 0 : index
    %c0_21 = arith.constant 0 : index
    %43 = vector.load %arg7[%c0_20, %c0_21] : memref<1x32xf32, #tpu.memory_space<vmem>>, vector<1x32xf32>
    %44 = vector.broadcast %43 : vector<1x32xf32> to vector<16x32xf32>
    %45 = arith.addf %42, %44 : vector<16x32xf32>
    %46 = arith.truncf %45 : vector<16x32xf32> to vector<16x32xbf16>
    %c0_22 = arith.constant 0 : index
    %c0_23 = arith.constant 0 : index
    %47 = vector.load %arg8[%c0_22, %c0_23] : memref<16x32xbf16, #tpu.memory_space<vmem>>, vector<16x32xbf16>
    tpu.vector_store %arg8[%c0_22, %c0_23], %46 {strides = array<i32>} : memref<16x32xbf16, #tpu.memory_space<vmem>>, vector<16x32xbf16>,
    return
  }
  func.func @transform_0(%arg0: i32) -> (i32, i32) {
    %c0_i32 = arith.constant 0 : i32
    %c0_i32_0 = arith.constant 0 : i32
    return %arg0, %c0_i32 : i32, i32
  }
  func.func @transform_1(%arg0: i32) -> (i32, i32) {
    %c0_i32 = arith.constant 0 : i32
    %c0_i32_0 = arith.constant 0 : i32
    %c0_i32_1 = arith.constant 0 : i32
    return %c0_i32, %c0_i32_0 : i32, i32
  }
  func.func @transform_2(%arg0: i32) -> (i32, i32) {
    %c0_i32 = arith.constant 0 : i32
    %c0_i32_0 = arith.constant 0 : i32
    %c0_i32_1 = arith.constant 0 : i32
    return %c0_i32, %c0_i32_0 : i32, i32
  }
  func.func @transform_3(%arg0: i32) -> (i32, i32) {
    %c0_i32 = arith.constant 0 : i32
    %c0_i32_0 = arith.constant 0 : i32
    %c0_i32_1 = arith.constant 0 : i32
    return %c0_i32, %c0_i32_0 : i32, i32
  }
  func.func @transform_4(%arg0: i32) -> (i32, i32) {
    %c0_i32 = arith.constant 0 : i32
    %c0_i32_0 = arith.constant 0 : i32
    %c0_i32_1 = arith.constant 0 : i32
    return %c0_i32, %c0_i32_0 : i32, i32
  }
  func.func @transform_5(%arg0: i32) -> (i32, i32) {
    %c0_i32 = arith.constant 0 : i32
    %c0_i32_0 = arith.constant 0 : i32
    %c0_i32_1 = arith.constant 0 : i32
    return %c0_i32, %c0_i32_0 : i32, i32
  }
  func.func @transform_6(%arg0: i32) -> (i32, i32) {
    %c0_i32 = arith.constant 0 : i32
    %c0_i32_0 = arith.constant 0 : i32
    %c0_i32_1 = arith.constant 0 : i32
    return %c0_i32, %c0_i32_0 : i32, i32
  }
  func.func @transform_7(%arg0: i32) -> (i32, i32) {
    %c0_i32 = arith.constant 0 : i32
    %c0_i32_0 = arith.constant 0 : i32
    return %arg0, %c0_i32 : i32, i32
  }
}

module attributes {stable_mosaic.version = 11 : i64} {
  func.func @_pooler_head_kernel(%arg0: i32, %arg1: memref<2x32xbf16, #tpu.memory_space<vmem>>, %arg2: memref<32x32xbf16, #tpu.memory_space<vmem>>, %arg3: memref<1x32xf32, #tpu.memory_space<vmem>>, %arg4: memref<32x6xbf16, #tpu.memory_space<vmem>>, %arg5: memref<1x6xf32, #tpu.memory_space<vmem>>, %arg6: memref<2x6xf32, #tpu.memory_space<vmem>>) attributes {dimension_semantics = [#tpu.dimension_semantics<arbitrary>], iteration_bounds = array<i64: 1>, scalar_prefetch = 0 : i64, scratch_operands = 0 : i64, tpu.core_type = #tpu.core_type<tc>, window_params = [{pipeline_mode = #tpu.pipeline_mode<synchronous>, transform_indices = @transform_0, window_bounds = array<i64: 2, 32>}, {pipeline_mode = #tpu.pipeline_mode<synchronous>, transform_indices = @transform_1, window_bounds = array<i64: 32, 32>}, {pipeline_mode = #tpu.pipeline_mode<synchronous>, transform_indices = @transform_2, window_bounds = array<i64: 1, 32>}, {pipeline_mode = #tpu.pipeline_mode<synchronous>, transform_indices = @transform_3, window_bounds = array<i64: 32, 6>}, {pipeline_mode = #tpu.pipeline_mode<synchronous>, transform_indices = @transform_4, window_bounds = array<i64: 1, 6>}, {pipeline_mode = #tpu.pipeline_mode<synchronous>, transform_indices = @transform_5, window_bounds = array<i64: 2, 6>}]} {
    %c0 = arith.constant 0 : index
    %c0_0 = arith.constant 0 : index
    %0 = vector.load %arg1[%c0, %c0_0] : memref<2x32xbf16, #tpu.memory_space<vmem>>, vector<2x32xbf16>
    %c0_1 = arith.constant 0 : index
    %c0_2 = arith.constant 0 : index
    %1 = vector.load %arg2[%c0_1, %c0_2] : memref<32x32xbf16, #tpu.memory_space<vmem>>, vector<32x32xbf16>
    %cst = arith.constant dense<0.000000e+00> : vector<2x32xf32>
    %2 = tpu.matmul %0, %1, %cst {dimension_numbers = #tpu.dot_dimension_numbers<[1], [0], [0], [1], [0, 0, 1, 1], [], []>} : vector<2x32xbf16>, vector<32x32xbf16>, vector<2x32xf32> -> vector<2x32xf32>
    %c0_3 = arith.constant 0 : index
    %c0_4 = arith.constant 0 : index
    %3 = vector.load %arg3[%c0_3, %c0_4] : memref<1x32xf32, #tpu.memory_space<vmem>>, vector<1x32xf32>
    %4 = vector.broadcast %3 : vector<1x32xf32> to vector<2x32xf32>
    %5 = arith.addf %2, %4 : vector<2x32xf32>
    %6 = math.tanh %5 : vector<2x32xf32>
    %7 = arith.truncf %6 : vector<2x32xf32> to vector<2x32xbf16>
    %c0_5 = arith.constant 0 : index
    %c0_6 = arith.constant 0 : index
    %8 = vector.load %arg4[%c0_5, %c0_6] : memref<32x6xbf16, #tpu.memory_space<vmem>>, vector<32x6xbf16>
    %cst_7 = arith.constant dense<0.000000e+00> : vector<2x6xf32>
    %9 = tpu.matmul %7, %8, %cst_7 {dimension_numbers = #tpu.dot_dimension_numbers<[1], [0], [0], [1], [0, 0, 1, 1], [], []>} : vector<2x32xbf16>, vector<32x6xbf16>, vector<2x6xf32> -> vector<2x6xf32>
    %c0_8 = arith.constant 0 : index
    %c0_9 = arith.constant 0 : index
    %10 = vector.load %arg5[%c0_8, %c0_9] : memref<1x6xf32, #tpu.memory_space<vmem>>, vector<1x6xf32>
    %11 = vector.broadcast %10 : vector<1x6xf32> to vector<2x6xf32>
    %12 = arith.addf %9, %11 : vector<2x6xf32>
    %c0_10 = arith.constant 0 : index
    %c0_11 = arith.constant 0 : index
    %13 = vector.load %arg6[%c0_10, %c0_11] : memref<2x6xf32, #tpu.memory_space<vmem>>, vector<2x6xf32>
    tpu.vector_store %arg6[%c0_10, %c0_11], %12 {strides = array<i32>} : memref<2x6xf32, #tpu.memory_space<vmem>>, vector<2x6xf32>,
    return
  }
  func.func @transform_0(%arg0: i32) -> (i32, i32) {
    %c0_i32 = arith.constant 0 : i32
    %c0_i32_0 = arith.constant 0 : i32
    %c0_i32_1 = arith.constant 0 : i32
    return %c0_i32, %c0_i32_0 : i32, i32
  }
  func.func @transform_1(%arg0: i32) -> (i32, i32) {
    %c0_i32 = arith.constant 0 : i32
    %c0_i32_0 = arith.constant 0 : i32
    %c0_i32_1 = arith.constant 0 : i32
    return %c0_i32, %c0_i32_0 : i32, i32
  }
  func.func @transform_2(%arg0: i32) -> (i32, i32) {
    %c0_i32 = arith.constant 0 : i32
    %c0_i32_0 = arith.constant 0 : i32
    %c0_i32_1 = arith.constant 0 : i32
    return %c0_i32, %c0_i32_0 : i32, i32
  }
  func.func @transform_3(%arg0: i32) -> (i32, i32) {
    %c0_i32 = arith.constant 0 : i32
    %c0_i32_0 = arith.constant 0 : i32
    %c0_i32_1 = arith.constant 0 : i32
    return %c0_i32, %c0_i32_0 : i32, i32
  }
  func.func @transform_4(%arg0: i32) -> (i32, i32) {
    %c0_i32 = arith.constant 0 : i32
    %c0_i32_0 = arith.constant 0 : i32
    %c0_i32_1 = arith.constant 0 : i32
    return %c0_i32, %c0_i32_0 : i32, i32
  }
  func.func @transform_5(%arg0: i32) -> (i32, i32) {
    %c0_i32 = arith.constant 0 : i32
    %c0_i32_0 = arith.constant 0 : i32
    %c0_i32_1 = arith.constant 0 : i32
    return %c0_i32, %c0_i32_0 : i32, i32
  }
}

</mosaic_0001>

<llo_original>
// kernel: classifier_forward.11
$region0: #{classifier_forward.11}
  #allocation0 [shape = 'u32[]', space=smem, size = 0x4, offset = 0x4, fixed_abs, tag = 'smem constant byte address 0x4 - core index']
  #allocation1 [shape = 'u32[72,128]{1,0:T(1,128)}', space=vmem, size = 0x9000, scoped, tag = 'internal scratch']
  %s0 = inlined_call_operand.vmem [shape: bf16[16,32], index: 0, kind: input, shape index: {}]
  %s1 = inlined_call_operand.vmem [shape: bf16[32,96], index: 1, kind: input, shape index: {}]
  %s2 = inlined_call_operand.vmem [shape: f32[1,96], index: 2, kind: input, shape index: {}]
  %s3 = inlined_call_operand.vmem [shape: bf16[16,96], index: 3, kind: output, shape index: {}]
  %s4 = sld [smem:[#allocation0]]
  $region22: #{classifier_forward.11} parent=0
    _
  %s6 = ssub.s32 1, %s4
  %s7 = scalar_select 0, %s6, %s4
  // Predicated region
  $region2: #{classifier_forward.11} parent=0 // pred_check
    _
  $region3: #{classifier_forward.11} parent=0 // pred_check_branch
    %9 = sbr.rel (0) target = $region5
  $region4: #{classifier_forward.11} parent=0 // pred_region
    _
  $region5: #{classifier_forward.11} parent=0 // pred_fallthru
    _
  // Predicated region
  $region6: #{classifier_forward.11} parent=0 // pred_check
    _
  $region7: #{classifier_forward.11} parent=0 // pred_check_branch
    %11 = sbr.rel (0) target = $region9
  $region8: #{classifier_forward.11} parent=0 // pred_region
    _
  $region9: #{classifier_forward.11} parent=0 // pred_fallthru
    _
  // Predicated region
  $region10: #{classifier_forward.11} parent=0 // pred_check
    _
  $region11: #{classifier_forward.11} parent=0 // pred_check_branch
    %13 = sbr.rel (0) target = $region13
  $region12: #{classifier_forward.11} parent=0 // pred_region
    _
  $region13: #{classifier_forward.11} parent=0 // pred_fallthru
    _
  %v15 = vld [vmem:[%s0] sm:$0xf]
  %v16 = vld [vmem:[%s0 + $0x4] sm:$0xf]
  %v17 = vld [vmem:[%s1] sm:$0xf]
  %v18 = vld [vmem:[%s1 + $0x4] sm:$0xf]
  %v19 = vld [vmem:[%s1 + $0x8] sm:$0xf]
  %v20 = vld [vmem:[%s1 + $0xc] sm:$0xf]
  %v21 = vld [vmem:[%s2] sm:$0x1]
  %v23 = vperm.slane %v21, 0
  %v27 = vunpack.c.l.b16 %v15
  %v28 = vunpack.c.l.b16 %v16
  %v29 = vpack.c.b16 %v28, %v27
  %v34 = vunpack.c.l.b16 %v17
  %v35 = vunpack.c.l.b16 %v18
  %v36 = vunpack.c.l.b16 %v19
  %v37 = vunpack.c.l.b16 %v20
  %v38 = vpack.c.b16 %v35, %v34
  %v39 = vpack.c.b16 %v37, %v36
  %vm42 = vcmask 261120
  %v44 = vsel %vm42, %v29, 0
  %46 = vmatpush.bf16.msra.mxu0 0
  %47 = vmatpush.bf16.msra.mxu0 0
  %48 = vmatpush.bf16.msra.mxu0 0
  %49 = vmatpush.bf16.msra.mxu0 0
  %50 = vmatpush.bf16.msra.mxu0 0
  %51 = vmatpush.bf16.msra.mxu0 0
  %52 = vmatpush.bf16.msra.mxu0 %v39
  %53 = vmatpush.bf16.msra.mxu0 %v38
  %54 = vmatmul.bf16.gmra.mxu0 %v44
  %v55 = vpop.f32.mrf.mxu0
  %v56 = vadd.f32 %v23, %v55
  %v57 = vpop.f32.mrf.mxu0
  %v58 = vadd.f32 %v23, %v57
  %59 = vdwg.mxu0
  %v60 = vpack.c.bf16 %v56, %v56
  %v61 = vpack.c.bf16 %v58, %v58
  %vm62 = vcmask 781312
  %63 = vst.msk [vmem:[%s3] sm:$0xf] %vm62, %v60
  %64 = vst.msk [vmem:[%s3 + $0x4] sm:$0xf] %vm62, %v61
  // Predicated region
  $region14: #{classifier_forward.11} parent=0 // pred_check
    _
  $region15: #{classifier_forward.11} parent=0 // pred_check_branch
    %66 = sbr.rel (0) target = $region17
  $region16: #{classifier_forward.11} parent=0 // pred_region
    _
  $region17: #{classifier_forward.11} parent=0 // pred_fallthru
    _
  // Predicated region
  $region18: #{classifier_forward.11} parent=0 // pred_check
    _
  $region19: #{classifier_forward.11} parent=0 // pred_check_branch
    %68 = sbr.rel (0) target = $region21
  $region20: #{classifier_forward.11} parent=0 // pred_region
    _
  $region21: #{classifier_forward.11} parent=0 // pred_fallthru
    _

// kernel: classifier_forward.10
$region0: #{classifier_forward.10}
  #allocation0 [shape = 'u32[]', space=smem, size = 0x4, offset = 0x4, fixed_abs, tag = 'smem constant byte address 0x4 - core index']
  #allocation1 [shape = 'u32[72,128]{1,0:T(1,128)}', space=vmem, size = 0x9000, scoped, tag = 'internal scratch']
  %s0 = inlined_call_operand.vmem [shape: bf16[16,32], index: 0, kind: input, shape index: {}]
  %s1 = inlined_call_operand.vmem [shape: f32[1,32], index: 1, kind: input, shape index: {}]
  %s2 = inlined_call_operand.vmem [shape: f32[1,32], index: 2, kind: input, shape index: {}]
  %s3 = inlined_call_operand.vmem [shape: bf16[16,32], index: 3, kind: output, shape index: {}]
  %s4 = sld [smem:[#allocation0]]
  $region22: #{classifier_forward.10} parent=0
    _
  %s6 = ssub.s32 1, %s4
  %s7 = scalar_select 0, %s6, %s4
  // Predicated region
  $region2: #{classifier_forward.10} parent=0 // pred_check
    _
  $region3: #{classifier_forward.10} parent=0 // pred_check_branch
    %9 = sbr.rel (0) target = $region5
  $region4: #{classifier_forward.10} parent=0 // pred_region
    _
  $region5: #{classifier_forward.10} parent=0 // pred_fallthru
    _
  // Predicated region
  $region6: #{classifier_forward.10} parent=0 // pred_check
    _
  $region7: #{classifier_forward.10} parent=0 // pred_check_branch
    %11 = sbr.rel (0) target = $region9
  $region8: #{classifier_forward.10} parent=0 // pred_region
    _
  $region9: #{classifier_forward.10} parent=0 // pred_fallthru
    _
  // Predicated region
  $region10: #{classifier_forward.10} parent=0 // pred_check
    _
  $region11: #{classifier_forward.10} parent=0 // pred_check_branch
    %13 = sbr.rel (0) target = $region13
  $region12: #{classifier_forward.10} parent=0 // pred_region
    _
  $region13: #{classifier_forward.10} parent=0 // pred_fallthru
    _
  %v14 = vld [vmem:[%s0] sm:$0xf]
  %v15 = vld [vmem:[%s0 + $0x4] sm:$0xf]
  %v16 = vunpack.c.l.bf16 %v14
  %v17 = vunpack.c.l.bf16 %v15
  %vm18 = vcmask 261120
  %v19 = vsel %vm18, %v16, 0.0
  %20 = vadd.xlane.f32.xlu0 %v19
  %v21 = vpop.xlane.xlu0 %20
  %v22 = vsel %vm18, %v17, 0.0
  %23 = vadd.xlane.f32.xlu0 %v22
  %v24 = vpop.xlane.xlu0 %23
  %v25 = vrcp.pop 32.0
  %v26 = vmul.f32 32.0, %v25
  %v27 = vsub.f32 1.0, %v26
  %v28 = vmul.f32 %v25, %v27
  %v29 = vadd.f32 %v25, %v28
  %vm30 = vweird.f32 %v25
  %v31 = vsel %vm30, %v25, %v29
  %v32 = vmul.f32 %v21, %v31
  %v33 = vmul.f32 %v24, %v31
  %v34 = vsub.f32 %v16, %v32
  %v35 = vsub.f32 %v17, %v33
  %v36 = vmul.f32 %v34, %v34
  %v37 = vmul.f32 %v35, %v35
  %v38 = vsel %vm18, %v36, 0.0
  %39 = vadd.xlane.f32.xlu0 %v38
  %v40 = vpop.xlane.xlu0 %39
  %v41 = vsel %vm18, %v37, 0.0
  %42 = vadd.xlane.f32.xlu0 %v41
  %v43 = vpop.xlane.xlu0 %42
  %v44 = vmul.f32 %v40, %v31
  %v45 = vmul.f32 %v43, %v31
  %v46 = vadd.f32 %v44, 1e-12
  %v47 = vadd.f32 %v45, 1e-12
  %v48 = vrsqrt.pop %v46
  %v49 = vmul.f32 %v48, %v46
  %v50 = vmul.f32 %v49, %v48
  %v51 = vmul.f32 0.5, %v50
  %v52 = vsub.f32 1.5, %v51
  %v53 = vmul.f32 %v48, %v52
  %vm54 = vweird.f32 %v46
  %vm55 = vweird.f32 %v48
  %vm56 = vmor %vm54, %vm55
  %v57 = vsel %vm56, %v48, %v53
  %v58 = vrsqrt.pop %v47
  %v59 = vmul.f32 %v58, %v47
  %v60 = vmul.f32 %v59, %v58
  %v61 = vmul.f32 0.5, %v60
  %v62 = vsub.f32 1.5, %v61
  %v63 = vmul.f32 %v58, %v62
  %vm64 = vweird.f32 %v47
  %vm65 = vweird.f32 %v58
  %vm66 = vmor %vm64, %vm65
  %v67 = vsel %vm66, %v58, %v63
  %v68 = vmul.f32 %v34, %v57
  %v69 = vmul.f32 %v35, %v67
  %v70 = vld [vmem:[%s1] sm:$0x1]
  %v72 = vperm.slane %v70, 0
  %v74 = vmul.f32 %v68, %v72
  %v75 = vmul.f32 %v69, %v72
  %v76 = vld [vmem:[%s2] sm:$0x1]
  %v78 = vperm.slane %v76, 0
  %v80 = vadd.f32 %v74, %v78
  %v81 = vadd.f32 %v75, %v78
  %v82 = vpack.c.bf16 %v80, %v80
  %v83 = vpack.c.bf16 %v81, %v81
  %vm84 = vcmask 257024
  %85 = vst.msk [vmem:[%s3] sm:$0xf] %vm84, %v82
  %86 = vst.msk [vmem:[%s3 + $0x4] sm:$0xf] %vm84, %v83
  // Predicated region
  $region14: #{classifier_forward.10} parent=0 // pred_check
    _
  $region15: #{classifier_forward.10} parent=0 // pred_check_branch
    %88 = sbr.rel (0) target = $region17
  $region16: #{classifier_forward.10} parent=0 // pred_region
    _
  $region17: #{classifier_forward.10} parent=0 // pred_fallthru
    _
  // Predicated region
  $region18: #{classifier_forward.10} parent=0 // pred_check
    _
  $region19: #{classifier_forward.10} parent=0 // pred_check_branch
    %90 = sbr.rel (0) target = $region21
  $region20: #{classifier_forward.10} parent=0 // pred_region
    _
  $region21: #{classifier_forward.10} parent=0 // pred_fallthru
    _

// kernel: classifier_forward.13
$region0: #{classifier_forward.13}
  #allocation0 [shape = 'u32[]', space=smem, size = 0x4, offset = 0x4, fixed_abs, tag = 'smem constant byte address 0x4 - core index']
  #allocation1 [shape = 'u32[72,128]{1,0:T(1,128)}', space=vmem, size = 0x9000, scoped, tag = 'internal scratch']
  %s0 = inlined_call_operand.vmem [shape: bf16[16,32], index: 0, kind: input, shape index: {}]
  %s1 = inlined_call_operand.vmem [shape: bf16[32,32], index: 1, kind: input, shape index: {}]
  %s2 = inlined_call_operand.vmem [shape: f32[1,32], index: 2, kind: input, shape index: {}]
  %s3 = inlined_call_operand.vmem [shape: bf16[16,32], index: 3, kind: input, shape index: {}]
  %s4 = inlined_call_operand.vmem [shape: f32[1,32], index: 4, kind: input, shape index: {}]
  %s5 = inlined_call_operand.vmem [shape: f32[1,32], index: 5, kind: input, shape index: {}]
  %s6 = inlined_call_operand.vmem [shape: bf16[16,32], index: 6, kind: output, shape index: {}]
  %s7 = sld [smem:[#allocation0]]
  $region34: #{classifier_forward.13} parent=0
    _
  %s9 = ssub.s32 1, %s7
  %s10 = scalar_select 0, %s9, %s7
  // Predicated region
  $region2: #{classifier_forward.13} parent=0 // pred_check
    _
  $region3: #{classifier_forward.13} parent=0 // pred_check_branch
    %12 = sbr.rel (0) target = $region5
  $region4: #{classifier_forward.13} parent=0 // pred_region
    _
  $region5: #{classifier_forward.13} parent=0 // pred_fallthru
    _
  // Predicated region
  $region6: #{classifier_forward.13} parent=0 // pred_check
    _
  $region7: #{classifier_forward.13} parent=0 // pred_check_branch
    %14 = sbr.rel (0) target = $region9
  $region8: #{classifier_forward.13} parent=0 // pred_region
    _
  $region9: #{classifier_forward.13} parent=0 // pred_fallthru
    _
  // Predicated region
  $region10: #{classifier_forward.13} parent=0 // pred_check
    _
  $region11: #{classifier_forward.13} parent=0 // pred_check_branch
    %16 = sbr.rel (0) target = $region13
  $region12: #{classifier_forward.13} parent=0 // pred_region
    _
  $region13: #{classifier_forward.13} parent=0 // pred_fallthru
    _
  // Predicated region
  $region14: #{classifier_forward.13} parent=0 // pred_check
    _
  $region15: #{classifier_forward.13} parent=0 // pred_check_branch
    %18 = sbr.rel (0) target = $region17
  $region16: #{classifier_forward.13} parent=0 // pred_region
    _
  $region17: #{classifier_forward.13} parent=0 // pred_fallthru
    _
  // Predicated region
  $region18: #{classifier_forward.13} parent=0 // pred_check
    _
  $region19: #{classifier_forward.13} parent=0 // pred_check_branch
    %20 = sbr.rel (0) target = $region21
  $region20: #{classifier_forward.13} parent=0 // pred_region
    _
  $region21: #{classifier_forward.13} parent=0 // pred_fallthru
    _
  // Predicated region
  $region22: #{classifier_forward.13} parent=0 // pred_check
    _
  $region23: #{classifier_forward.13} parent=0 // pred_check_branch
    %22 = sbr.rel (0) target = $region25
  $region24: #{classifier_forward.13} parent=0 // pred_region
    _
  $region25: #{classifier_forward.13} parent=0 // pred_fallthru
    _
  %v24 = vld [vmem:[%s0] sm:$0xf]
  %v25 = vld [vmem:[%s0 + $0x4] sm:$0xf]
  %v26 = vld [vmem:[%s1] sm:$0xf]
  %v27 = vld [vmem:[%s1 + $0x4] sm:$0xf]
  %v28 = vld [vmem:[%s1 + $0x8] sm:$0xf]
  %v29 = vld [vmem:[%s1 + $0xc] sm:$0xf]
  %v30 = vld [vmem:[%s2] sm:$0x1]
  %v32 = vperm.slane %v30, 0
  %v36 = vunpack.c.l.b16 %v24
  %v37 = vunpack.c.l.b16 %v25
  %v38 = vpack.c.b16 %v37, %v36
  %v43 = vunpack.c.l.b16 %v26
  %v44 = vunpack.c.l.b16 %v27
  %v45 = vunpack.c.l.b16 %v28
  %v46 = vunpack.c.l.b16 %v29
  %v47 = vpack.c.b16 %v44, %v43
  %v48 = vpack.c.b16 %v46, %v45
  %vm51 = vcmask 261120
  %v53 = vsel %vm51, %v38, 0
  %55 = vmatpush.bf16.msra.mxu0 0
  %56 = vmatpush.bf16.msra.mxu0 0
  %57 = vmatpush.bf16.msra.mxu0 0
  %58 = vmatpush.bf16.msra.mxu0 0
  %59 = vmatpush.bf16.msra.mxu0 0
  %60 = vmatpush.bf16.msra.mxu0 0
  %61 = vmatpush.bf16.msra.mxu0 %v48
  %62 = vmatpush.bf16.msra.mxu0 %v47
  %63 = vmatmul.bf16.gmra.mxu0 %v53
  %v64 = vpop.f32.mrf.mxu0
  %v65 = vadd.f32 %v32, %v64
  %v66 = vpop.f32.mrf.mxu0
  %v67 = vadd.f32 %v32, %v66
  %68 = vdwg.mxu0
  %v69 = vld [vmem:[%s3] sm:$0xf]
  %v70 = vld [vmem:[%s3 + $0x4] sm:$0xf]
  %v71 = vunpack.c.l.bf16 %v69
  %v72 = vunpack.c.l.bf16 %v70
  %v73 = vadd.f32 %v65, %v71
  %v74 = vadd.f32 %v67, %v72
  %v75 = vsel %vm51, %v73, 0.0
  %76 = vadd.xlane.f32.xlu0 %v75
  %v77 = vpop.xlane.xlu0 %76
  %v78 = vsel %vm51, %v74, 0.0
  %79 = vadd.xlane.f32.xlu0 %v78
  %v80 = vpop.xlane.xlu0 %79
  %v81 = vrcp.pop 32.0
  %v82 = vmul.f32 32.0, %v81
  %v83 = vsub.f32 1.0, %v82
  %v84 = vmul.f32 %v81, %v83
  %v85 = vadd.f32 %v81, %v84
  %vm86 = vweird.f32 %v81
  %v87 = vsel %vm86, %v81, %v85
  %v88 = vmul.f32 %v77, %v87
  %v89 = vmul.f32 %v80, %v87
  %v90 = vsub.f32 %v73, %v88
  %v91 = vsub.f32 %v74, %v89
  %v92 = vmul.f32 %v90, %v90
  %v93 = vmul.f32 %v91, %v91
  %v94 = vsel %vm51, %v92, 0.0
  %95 = vadd.xlane.f32.xlu0 %v94
  %v96 = vpop.xlane.xlu0 %95
  %v97 = vsel %vm51, %v93, 0.0
  %98 = vadd.xlane.f32.xlu0 %v97
  %v99 = vpop.xlane.xlu0 %98
  %v100 = vmul.f32 %v96, %v87
  %v101 = vmul.f32 %v99, %v87
  %v102 = vadd.f32 %v100, 1e-12
  %v103 = vadd.f32 %v101, 1e-12
  %v104 = vrsqrt.pop %v102
  %v105 = vmul.f32 %v104, %v102
  %v106 = vmul.f32 %v105, %v104
  %v107 = vmul.f32 0.5, %v106
  %v108 = vsub.f32 1.5, %v107
  %v109 = vmul.f32 %v104, %v108
  %vm110 = vweird.f32 %v102
  %vm111 = vweird.f32 %v104
  %vm112 = vmor %vm110, %vm111
  %v113 = vsel %vm112, %v104, %v109
  %v114 = vrsqrt.pop %v103
  %v115 = vmul.f32 %v114, %v103
  %v116 = vmul.f32 %v115, %v114
  %v117 = vmul.f32 0.5, %v116
  %v118 = vsub.f32 1.5, %v117
  %v119 = vmul.f32 %v114, %v118
  %vm120 = vweird.f32 %v103
  %vm121 = vweird.f32 %v114
  %vm122 = vmor %vm120, %vm121
  %v123 = vsel %vm122, %v114, %v119
  %v124 = vmul.f32 %v90, %v113
  %v125 = vmul.f32 %v91, %v123
  %v126 = vld [vmem:[%s4] sm:$0x1]
  %v128 = vperm.slane %v126, 0
  %v130 = vmul.f32 %v124, %v128
  %v131 = vmul.f32 %v125, %v128
  %v132 = vld [vmem:[%s5] sm:$0x1]
  %v134 = vperm.slane %v132, 0
  %v136 = vadd.f32 %v130, %v134
  %v137 = vadd.f32 %v131, %v134
  %v138 = vpack.c.bf16 %v136, %v136
  %v139 = vpack.c.bf16 %v137, %v137
  %vm140 = vcmask 257024
  %141 = vst.msk [vmem:[%s6] sm:$0xf] %vm140, %v138
  %142 = vst.msk [vmem:[%s6 + $0x4] sm:$0xf] %vm140, %v139
  // Predicated region
  $region26: #{classifier_forward.13} parent=0 // pred_check
    _
  $region27: #{classifier_forward.13} parent=0 // pred_check_branch
    %144 = sbr.rel (0) target = $region29
  $region28: #{classifier_forward.13} parent=0 // pred_region
    _
  $region29: #{classifier_forward.13} parent=0 // pred_fallthru
    _
  // Predicated region
  $region30: #{classifier_forward.13} parent=0 // pred_check
    _
  $region31: #{classifier_forward.13} parent=0 // pred_check_branch
    %146 = sbr.rel (0) target = $region33
  $region32: #{classifier_forward.13} parent=0 // pred_region
    _
  $region33: #{classifier_forward.13} parent=0 // pred_fallthru
    _

// kernel: classifier_forward.12
$region0: #{classifier_forward.12}
  #allocation0 [shape = 'u32[]', space=smem, size = 0x4, offset = 0x4, fixed_abs, tag = 'smem constant byte address 0x4 - core index']
  #allocation1 [shape = 'u32[72,128]{1,0:T(1,128)}', space=vmem, size = 0x9000, scoped, tag = 'internal scratch']
  %s0 = inlined_call_operand.vmem [shape: bf16[2,8,96], index: 0, kind: input, shape index: {}]
  %s1 = inlined_call_operand.vmem [shape: f32[2,1,8], index: 1, kind: input, shape index: {}]
  %s2 = inlined_call_operand.vmem [shape: bf16[2,8,32], index: 2, kind: output, shape index: {}]
  %s3 = sld [smem:[#allocation0]]
  $region41: #{classifier_forward.12} parent=0
    _
  %s5 = ssub.s32 1, %s3
  %s6 = scalar_select 0, %s5, %s3
  loop: start=0, step=1, limit=4
  $region2: #{classifier_forward.12} parent=0 // loop_pre_header
    _
  $region3: #{classifier_forward.12} parent=0 // loop_header
    %s8 = sphi 0, %s12
    %p9 = scmp.ge.s32.totalorder %s8, 4
    %s18 = sphi 0, %s20
    %s21 = sphi 0, %s18
    %s22 = sphi 0, %s21
    %s38 = sphi 0, %s22
    %s44 = sphi 0, %s46
    %s47 = sphi 0, %s44
    %s48 = sphi 0, %s47
    %s64 = sphi 0, %s48
    %s70 = sphi 0, %s72
    %s73 = sphi 0, %s70
    %s74 = sphi 0, %s73
    %s90 = sphi 0, %s74
  $region4: #{classifier_forward.12} parent=0 // loop_header_branch
    %11 = sbr.rel (%p9) target = $region8
  $region5: #{classifier_forward.12} parent=0 // loop_body
    %s13 = ssub.s32 %s8, 1
    %s14 = ssub.s32 %s8, 2
    %s15 = sadd.s32 %s8, 1
    %s16 = ssub.s32 %s8, %s15
    %p17 = scmp.eq.s32.totalorder %s16, 0
    %s19 = sadd.s32 %s18, 1
    %s20 = scalar_select %p17, %s18, %s19
    %p23 = pneg %p17
    %p24 = scmp.eq.s32.totalorder %s8, 1
    %p25 = por %p23, %p24
    %p26 = scmp.ne.s32.totalorder %s18, %s21
    %p27 = scmp.eq.s32.totalorder %s8, 0
    %p28 = por %p26, %p27
    %p29 = scmp.ne.s32.totalorder %s18, %s21
    %p30 = scmp.eq.s32.totalorder %s13, 1
    %p31 = por %p29, %p30
    %p32 = scmp.ne.s32.totalorder %s21, %s22
    %p33 = scmp.eq.s32.totalorder %s13, 0
    %p34 = por %p32, %p33
    %p35 = scmp.ne.s32.totalorder %s21, %s22
    %p36 = scmp.eq.s32.totalorder %s14, 1
    %p37 = por %p35, %p36
    %p39 = scmp.ne.s32.totalorder %s22, %s38
    %p40 = scmp.eq.s32.totalorder %s14, 0
    %p41 = por %p39, %p40
    %s42 = ssub.s32 %s8, %s15
    %p43 = scmp.eq.s32.totalorder %s42, 0
    %s45 = sadd.s32 %s44, 1
    %s46 = scalar_select %p43, %s44, %s45
    %p49 = pneg %p43
    %p50 = scmp.eq.s32.totalorder %s8, 1
    %p51 = por %p49, %p50
    %p52 = scmp.ne.s32.totalorder %s44, %s47
    %p53 = scmp.eq.s32.totalorder %s8, 0
    %p54 = por %p52, %p53
    %p55 = scmp.ne.s32.totalorder %s44, %s47
    %p56 = scmp.eq.s32.totalorder %s13, 1
    %p57 = por %p55, %p56
    %p58 = scmp.ne.s32.totalorder %s47, %s48
    %p59 = scmp.eq.s32.totalorder %s13, 0
    %p60 = por %p58, %p59
    %p61 = scmp.ne.s32.totalorder %s47, %s48
    %p62 = scmp.eq.s32.totalorder %s14, 1
    %p63 = por %p61, %p62
    %p65 = scmp.ne.s32.totalorder %s48, %s64
    %p66 = scmp.eq.s32.totalorder %s14, 0
    %p67 = por %p65, %p66
    %s68 = ssub.s32 %s8, %s15
    %p69 = scmp.eq.s32.totalorder %s68, 0
    %s71 = sadd.s32 %s70, 1
    %s72 = scalar_select %p69, %s70, %s71
    %p75 = pneg %p69
    %p76 = scmp.eq.s32.totalorder %s8, 1
    %p77 = por %p75, %p76
    %p78 = scmp.ne.s32.totalorder %s70, %s73
    %p79 = scmp.eq.s32.totalorder %s8, 0
    %p80 = por %p78, %p79
    %p81 = scmp.ne.s32.totalorder %s70, %s73
    %p82 = scmp.eq.s32.totalorder %s13, 1
    %p83 = por %p81, %p82
    %p84 = scmp.ne.s32.totalorder %s73, %s74
    %p85 = scmp.eq.s32.totalorder %s13, 0
    %p86 = por %p84, %p85
    %p87 = scmp.ne.s32.totalorder %s73, %s74
    %p88 = scmp.eq.s32.totalorder %s14, 1
    %p89 = por %p87, %p88
    %p91 = scmp.ne.s32.totalorder %s74, %s90
    %p92 = scmp.eq.s32.totalorder %s14, 0
    %p93 = por %p91, %p92
    %p94 = scmp.le.s32.totalorder 1, %s8
    %p95 = scmp.lt.s32.totalorder %s8, 3
    %p96 = pnand %p94, %p95
    %p97 = pneg %p96
    // Predicated region
    $region9: #{classifier_forward.12} parent=5 // pred_check
      _
    $region10: #{classifier_forward.12} parent=5 // pred_check_branch
      %99 = sbr.rel (%p96) target = $region12
    $region11: #{classifier_forward.12} parent=5 // pred_region
      %s100 = ssub.s32 %s8, 1
    $region12: #{classifier_forward.12} parent=5 // pred_fallthru
      _
    %p101 = scmp.lt.s32.totalorder %s8, 2
    // Predicated region
    $region13: #{classifier_forward.12} parent=5 // pred_check
      %p102 = pneg %p101
    $region14: #{classifier_forward.12} parent=5 // pred_check_branch
      %104 = sbr.rel (%p102) target = $region16
    $region15: #{classifier_forward.12} parent=5 // pred_region
      // Predicated region
      $region17: #{classifier_forward.12} parent=15 // pred_check
        %p105 = pneg %p28
      $region18: #{classifier_forward.12} parent=15 // pred_check_branch
        %107 = sbr.rel (%p105) target = $region20
      $region19: #{classifier_forward.12} parent=15 // pred_region
        %p108 = scmp.lt.s32.totalorder %s8, 1
        %s109 = scalar_select %p108, %s8, 1
        %s110 = smul.addr %s109, 4
        %s111 = scalar_lea.vmem %s0, %s110
      $region20: #{classifier_forward.12} parent=15 // pred_fallthru
        _
      // Predicated region
      $region21: #{classifier_forward.12} parent=15 // pred_check
        %p112 = pneg %p54
      $region22: #{classifier_forward.12} parent=15 // pred_check_branch
        %114 = sbr.rel (%p112) target = $region24
      $region23: #{classifier_forward.12} parent=15 // pred_region
        %p115 = scmp.lt.s32.totalorder %s8, 1
        %s116 = scalar_select %p115, %s8, 1
        %s117 = scalar_lea.vmem %s1, %s116
      $region24: #{classifier_forward.12} parent=15 // pred_fallthru
        _
    $region16: #{classifier_forward.12} parent=5 // pred_fallthru
      _
    %p118 = scmp.le.s32.totalorder 1, %s8
    %p119 = scmp.lt.s32.totalorder %s8, 3
    %p120 = pnand %p118, %p119
    %p121 = pneg %p120
    // Predicated region
    $region25: #{classifier_forward.12} parent=5 // pred_check
      _
    $region26: #{classifier_forward.12} parent=5 // pred_check_branch
      %123 = sbr.rel (%p120) target = $region28
    $region27: #{classifier_forward.12} parent=5 // pred_region
      %s124 = ssub.s32 %s8, 1
      %p125 = scmp.lt.s32.totalorder %s13, 1
      %s126 = scalar_select %p125, %s13, 1
      %s127 = smul.addr %s126, 4
      %s128 = scalar_lea.vmem %s0, %s127
      %p129 = pneg %p34
      %p130 = pneg %p31
      %p131 = scmp.lt.s32.totalorder %s13, 1
      %s132 = scalar_select %p131, %s13, 1
      %s133 = scalar_lea.vmem %s1, %s132
      %p134 = pneg %p60
      %p135 = pneg %p57
      %p136 = pneg %p86
      %p137 = pneg %p83
      %p138 = scmp.lt.s32.totalorder %s13, 1
      %s139 = scalar_select %p138, %s13, 1
      %s140 = smul.addr %s139, 4
      %s141 = scalar_lea.vmem %s2, %s140
      %p142 = scmp.lt.s32.totalorder %s13, 1
      %s143 = scalar_select %p142, %s13, 1
      %s144 = smul.addr %s143, 4
      %s145 = scalar_lea.vmem %s0, %s144
      %p146 = scmp.lt.s32.totalorder %s13, 1
      %s147 = scalar_select %p146, %s13, 1
      %s148 = scalar_lea.vmem %s1, %s147
      %p149 = scmp.lt.s32.totalorder %s13, 1
      %s150 = scalar_select %p149, %s13, 1
      %s151 = smul.addr %s150, 4
      %s152 = scalar_lea.vmem %s2, %s151
      %v154 = vld [vmem:[%s145] sm:$0xf]
      %v155 = vld [vmem:[%s148] sm:$0x1]
      %v157 = vperm.slane %v155, 0
      %v160 = vunpack.c.l.b16 %v154
      %v161 = vpack.c.b16 %v160, %v160
      %162 = vrot.lane.b32.xlu0 %v161, 96
      %v163 = vpop.permute.xlu0 %162
      %vm164 = vcmask 64512
      %v166 = vsel %vm164, %v154, 0
      %v169 = vsel %vm164, %v163, 0
      %171 = vmatpush.bf16.xpose.msra.mxu0 0
      %172 = vmatpush.bf16.xpose.msra.mxu0 0
      %173 = vmatpush.bf16.xpose.msra.mxu0 0
      %174 = vmatpush.bf16.xpose.msra.mxu0 0
      %175 = vmatpush.bf16.xpose.msra.mxu0 0
      %176 = vmatpush.bf16.xpose.msra.mxu0 0
      %177 = vmatpush.bf16.xpose.msra.mxu0 0
      %178 = vmatpush.bf16.xpose.msra.mxu0 %v169
      %179 = vmatmul.bf16.gmra.mxu0 %v166
      %v180 = vpop.f32.mrf.mxu0
      %v181 = vadd.f32 %v157, %v180
      %v182 = vpop.f32.mrf.mxu0
      %183 = vdwg.mxu0
      %v184 = vsel %vm164, %v181, -inf
      %185 = vmax.xlane.f32.xlu0 %v184
      %v186 = vpop.xlane.xlu0 %185
      %v187 = vsub.f32 %v181, %v186
      %v188 = vmul.f32 %v187, 1.442695
      %v189 = vpow.pop %v188
      %v190 = vsel %vm164, %v189, 0.0
      %191 = vadd.xlane.f32.xlu0 %v190
      %v192 = vpop.xlane.xlu0 %191
      %v193 = vrcp.pop %v192
      %v194 = vmul.f32 %v189, %v193
      %v195 = vpack.c.bf16 %v194, %v194
      %196 = vrot.lane.b32.xlu0 %v161, 64
      %v197 = vpop.permute.xlu0 %196
      %v199 = vsel %vm164, %v195, 0
      %vm201 = vcmask 1043456
      %v203 = vsel %vm201, %v197, 0
      %205 = vmatpush.bf16.msra.mxu0 0
      %206 = vmatpush.bf16.msra.mxu0 0
      %207 = vmatpush.bf16.msra.mxu0 0
      %208 = vmatpush.bf16.msra.mxu0 0
      %209 = vmatpush.bf16.msra.mxu0 0
      %210 = vmatpush.bf16.msra.mxu0 0
      %211 = vmatpush.bf16.msra.mxu0 0
      %212 = vmatpush.bf16.msra.mxu0 %v203
      %213 = vmatmul.bf16.gmra.mxu0 %v199
      %v214 = vpop.f32.mrf.mxu0
      %v215 = vadd.f32 0.0, %v214
      %v216 = vpop.f32.mrf.mxu0
      %217 = vdwg.mxu0
      %218 = vrot.lane.b32.xlu0 %v161, 120
      %v219 = vpop.permute.xlu0 %218
      %220 = vrot.lane.b32.xlu0 %v161, 88
      %v221 = vpop.permute.xlu0 %220
      %v223 = vsel %vm164, %v219, 0
      %v226 = vsel %vm164, %v221, 0
      %228 = vmatpush.bf16.xpose.msra.mxu0 0
      %229 = vmatpush.bf16.xpose.msra.mxu0 0
      %230 = vmatpush.bf16.xpose.msra.mxu0 0
      %231 = vmatpush.bf16.xpose.msra.mxu0 0
      %232 = vmatpush.bf16.xpose.msra.mxu0 0
      %233 = vmatpush.bf16.xpose.msra.mxu0 0
      %234 = vmatpush.bf16.xpose.msra.mxu0 0
      %235 = vmatpush.bf16.xpose.msra.mxu0 %v226
      %236 = vmatmul.bf16.gmra.mxu0 %v223
      %v237 = vpop.f32.mrf.mxu0
      %v238 = vadd.f32 %v157, %v237
      %v239 = vpop.f32.mrf.mxu0
      %240 = vdwg.mxu0
      %v241 = vsel %vm164, %v238, -inf
      %242 = vmax.xlane.f32.xlu0 %v241
      %v243 = vpop.xlane.xlu0 %242
      %v244 = vsub.f32 %v238, %v243
      %v245 = vmul.f32 %v244, 1.442695
      %v246 = vpow.pop %v245
      %v247 = vsel %vm164, %v246, 0.0
      %248 = vadd.xlane.f32.xlu0 %v247
      %v249 = vpop.xlane.xlu0 %248
      %v250 = vrcp.pop %v249
      %v251 = vmul.f32 %v246, %v250
      %v252 = vpack.c.bf16 %v251, %v251
      %253 = vrot.lane.b32.xlu0 %v161, 56
      %v254 = vpop.permute.xlu0 %253
      %v256 = vsel %vm164, %v252, 0
      %v259 = vsel %vm201, %v254, 0
      %261 = vmatpush.bf16.msra.mxu0 0
      %262 = vmatpush.bf16.msra.mxu0 0
      %263 = vmatpush.bf16.msra.mxu0 0
      %264 = vmatpush.bf16.msra.mxu0 0
      %265 = vmatpush.bf16.msra.mxu0 0
      %266 = vmatpush.bf16.msra.mxu0 0
      %267 = vmatpush.bf16.msra.mxu0 0
      %268 = vmatpush.bf16.msra.mxu0 %v259
      %269 = vmatmul.bf16.gmra.mxu0 %v256
      %v270 = vpop.f32.mrf.mxu0
      %v271 = vadd.f32 0.0, %v270
      %v272 = vpop.f32.mrf.mxu0
      %273 = vdwg.mxu0
      %274 = vrot.lane.b32.xlu0 %v161, 112
      %v275 = vpop.permute.xlu0 %274
      %276 = vrot.lane.b32.xlu0 %v161, 80
      %v277 = vpop.permute.xlu0 %276
      %v279 = vsel %vm164, %v275, 0
      %v282 = vsel %vm164, %v277, 0
      %284 = vmatpush.bf16.xpose.msra.mxu0 0
      %285 = vmatpush.bf16.xpose.msra.mxu0 0
      %286 = vmatpush.bf16.xpose.msra.mxu0 0
      %287 = vmatpush.bf16.xpose.msra.mxu0 0
      %288 = vmatpush.bf16.xpose.msra.mxu0 0
      %289 = vmatpush.bf16.xpose.msra.mxu0 0
      %290 = vmatpush.bf16.xpose.msra.mxu0 0
      %291 = vmatpush.bf16.xpose.msra.mxu0 %v282
      %292 = vmatmul.bf16.gmra.mxu0 %v279
      %v293 = vpop.f32.mrf.mxu0
      %v294 = vadd.f32 %v157, %v293
      %v295 = vpop.f32.mrf.mxu0
      %296 = vdwg.mxu0
      %v297 = vsel %vm164, %v294, -inf
      %298 = vmax.xlane.f32.xlu0 %v297
      %v299 = vpop.xlane.xlu0 %298
      %v300 = vsub.f32 %v294, %v299
      %v301 = vmul.f32 %v300, 1.442695
      %v302 = vpow.pop %v301
      %v303 = vsel %vm164, %v302, 0.0
      %304 = vadd.xlane.f32.xlu0 %v303
      %v305 = vpop.xlane.xlu0 %304
      %v306 = vrcp.pop %v305
      %v307 = vmul.f32 %v302, %v306
      %v308 = vpack.c.bf16 %v307, %v307
      %309 = vrot.lane.b32.xlu0 %v161, 48
      %v310 = vpop.permute.xlu0 %309
      %v312 = vsel %vm164, %v308, 0
      %v315 = vsel %vm201, %v310, 0
      %317 = vmatpush.bf16.msra.mxu0 0
      %318 = vmatpush.bf16.msra.mxu0 0
      %319 = vmatpush.bf16.msra.mxu0 0
      %320 = vmatpush.bf16.msra.mxu0 0
      %321 = vmatpush.bf16.msra.mxu0 0
      %322 = vmatpush.bf16.msra.mxu0 0
      %323 = vmatpush.bf16.msra.mxu0 0
      %324 = vmatpush.bf16.msra.mxu0 %v315
      %325 = vmatmul.bf16.gmra.mxu0 %v312
      %v326 = vpop.f32.mrf.mxu0
      %v327 = vadd.f32 0.0, %v326
      %v328 = vpop.f32.mrf.mxu0
      %329 = vdwg.mxu0
      %330 = vrot.lane.b32.xlu0 %v161, 104
      %v331 = vpop.permute.xlu0 %330
      %332 = vrot.lane.b32.xlu0 %v161, 72
      %v333 = vpop.permute.xlu0 %332
      %v335 = vsel %vm164, %v331, 0
      %v338 = vsel %vm164, %v333, 0
      %340 = vmatpush.bf16.xpose.msra.mxu0 0
      %341 = vmatpush.bf16.xpose.msra.mxu0 0
      %342 = vmatpush.bf16.xpose.msra.mxu0 0
      %343 = vmatpush.bf16.xpose.msra.mxu0 0
      %344 = vmatpush.bf16.xpose.msra.mxu0 0
      %345 = vmatpush.bf16.xpose.msra.mxu0 0
      %346 = vmatpush.bf16.xpose.msra.mxu0 0
      %347 = vmatpush.bf16.xpose.msra.mxu0 %v338
      %348 = vmatmul.bf16.gmra.mxu0 %v335
      %v349 = vpop.f32.mrf.mxu0
      %v350 = vadd.f32 %v157, %v349
      %v351 = vpop.f32.mrf.mxu0
      %352 = vdwg.mxu0
      %v353 = vsel %vm164, %v350, -inf
      %354 = vmax.xlane.f32.xlu0 %v353
      %v355 = vpop.xlane.xlu0 %354
      %v356 = vsub.f32 %v350, %v355
      %v357 = vmul.f32 %v356, 1.442695
      %v358 = vpow.pop %v357
      %v359 = vsel %vm164, %v358, 0.0
      %360 = vadd.xlane.f32.xlu0 %v359
      %v361 = vpop.xlane.xlu0 %360
      %v362 = vrcp.pop %v361
      %v363 = vmul.f32 %v358, %v362
      %v364 = vpack.c.bf16 %v363, %v363
      %365 = vrot.lane.b32.xlu0 %v161, 40
      %v366 = vpop.permute.xlu0 %365
      %v368 = vsel %vm164, %v364, 0
      %v371 = vsel %vm201, %v366, 0
      %373 = vmatpush.bf16.msra.mxu0 0
      %374 = vmatpush.bf16.msra.mxu0 0
      %375 = vmatpush.bf16.msra.mxu0 0
      %376 = vmatpush.bf16.msra.mxu0 0
      %377 = vmatpush.bf16.msra.mxu0 0
      %378 = vmatpush.bf16.msra.mxu0 0
      %379 = vmatpush.bf16.msra.mxu0 0
      %380 = vmatpush.bf16.msra.mxu0 %v371
      %381 = vmatmul.bf16.gmra.mxu0 %v368
      %v382 = vpop.f32.mrf.mxu0
      %v383 = vadd.f32 0.0, %v382
      %v384 = vpop.f32.mrf.mxu0
      %385 = vdwg.mxu0
      %387 = vrot.lane.b32.xlu0 %v271, 8
      %v388 = vpop.permute.xlu0 %387
      %391 = vrot.lane.b32.xlu0 %v327, 16
      %v392 = vpop.permute.xlu0 %391
      %395 = vrot.lane.b32.xlu0 %v383, 24
      %v396 = vpop.permute.xlu0 %395
      %v398 = vsel %vm164, %v215, %v388
      %vm399 = vcmask 130048
      %v400 = vsel %vm399, %v398, %v392
      %vm401 = vcmask 195584
      %v402 = vsel %vm401, %v400, %v396
      %v403 = vpack.c.bf16 %v402, %v402
      %vm404 = vcmask 257024
      %405 = vst.msk [vmem:[%s152] sm:$0xf] %vm404, %v403
      %p406 = scmp.lt.s32.totalorder %s13, 1
      %s407 = scalar_select %p406, %s13, 1
      %s408 = smul.addr %s407, 4
      %s409 = scalar_lea.vmem %s2, %s408
      // Predicated region
      $region29: #{classifier_forward.12} parent=27 // pred_check
        %p410 = pneg %p83
      $region30: #{classifier_forward.12} parent=27 // pred_check_branch
        %412 = sbr.rel (%p410) target = $region32
      $region31: #{classifier_forward.12} parent=27 // pred_region
        _
      $region32: #{classifier_forward.12} parent=27 // pred_fallthru
        _
    $region28: #{classifier_forward.12} parent=5 // pred_fallthru
      _
    %p413 = scmp.le.s32.totalorder 2, %s8
    // Predicated region
    $region33: #{classifier_forward.12} parent=5 // pred_check
      %p414 = pneg %p413
    $region34: #{classifier_forward.12} parent=5 // pred_check_branch
      %416 = sbr.rel (%p414) target = $region36
    $region35: #{classifier_forward.12} parent=5 // pred_region
      %s417 = ssub.s32 %s8, 2
      // Predicated region
      $region37: #{classifier_forward.12} parent=35 // pred_check
        %p418 = pneg %p89
      $region38: #{classifier_forward.12} parent=35 // pred_check_branch
        %420 = sbr.rel (%p418) target = $region40
      $region39: #{classifier_forward.12} parent=35 // pred_region
        %p421 = scmp.lt.s32.totalorder %s14, 1
        %s422 = scalar_select %p421, %s14, 1
        %s423 = smul.addr %s422, 4
        %s424 = scalar_lea.vmem %s2, %s423
      $region40: #{classifier_forward.12} parent=35 // pred_fallthru
        _
    $region36: #{classifier_forward.12} parent=5 // pred_fallthru
      _
  $region6: #{classifier_forward.12} parent=0 // loop_footer
    %s12 = sadd.s32 1, %s8
  $region7: #{classifier_forward.12} parent=0 // loop_footer_branch
    %7 = sbr.rel target = $region3
  $region8: #{classifier_forward.12} parent=0 // loop_exit
    _

// kernel: classifier_forward.19
$region0: #{classifier_forward.19}
  #allocation0 [shape = 'u32[]', space=smem, size = 0x4, offset = 0x4, fixed_abs, tag = 'smem constant byte address 0x4 - core index']
  #allocation1 [shape = 'u32[72,128]{1,0:T(1,128)}', space=vmem, size = 0x9000, scoped, tag = 'internal scratch']
  %s0 = inlined_call_operand.vmem [shape: bf16[2,32], index: 0, kind: input, shape index: {}]
  %s1 = inlined_call_operand.vmem [shape: bf16[32,32], index: 1, kind: input, shape index: {}]
  %s2 = inlined_call_operand.vmem [shape: f32[1,32], index: 2, kind: input, shape index: {}]
  %s3 = inlined_call_operand.vmem [shape: bf16[32,6], index: 3, kind: input, shape index: {}]
  %s4 = inlined_call_operand.vmem [shape: f32[1,6], index: 4, kind: input, shape index: {}]
  %s5 = inlined_call_operand.hbm [shape: f32[2,6], index: 5, kind: output, shape index: {}]
  %s6 = sld [smem:[#allocation0]]
  $region30: #{classifier_forward.19} parent=0
    _
  %s8 = ssub.s32 1, %s6
  %s9 = scalar_select 0, %s8, %s6
  $region1: #{classifier_forward.19} parent=0
    #allocation2 [shape = 'u8[1024]{0}', space=vmem, size = 0x400, scoped, tag = 'output window, operand 0, single buffered']
    #allocation3 [shape = 's32[1]{0}', space=sflag, size = 0x4, scoped, tag = 'scoped memory for classifier_forward.19']
    %10 = vsyncpa [#allocation3], 0
    // Predicated region
    $region2: #{classifier_forward.19} parent=1 // pred_check
      _
    $region3: #{classifier_forward.19} parent=1 // pred_check_branch
      %12 = sbr.rel (0) target = $region5
    $region4: #{classifier_forward.19} parent=1 // pred_region
      _
    $region5: #{classifier_forward.19} parent=1 // pred_fallthru
      _
    // Predicated region
    $region6: #{classifier_forward.19} parent=1 // pred_check
      _
    $region7: #{classifier_forward.19} parent=1 // pred_check_branch
      %14 = sbr.rel (0) target = $region9
    $region8: #{classifier_forward.19} parent=1 // pred_region
      _
    $region9: #{classifier_forward.19} parent=1 // pred_fallthru
      _
    // Predicated region
    $region10: #{classifier_forward.19} parent=1 // pred_check
      _
    $region11: #{classifier_forward.19} parent=1 // pred_check_branch
      %16 = sbr.rel (0) target = $region13
    $region12: #{classifier_forward.19} parent=1 // pred_region
      _
    $region13: #{classifier_forward.19} parent=1 // pred_fallthru
      _
    // Predicated region
    $region14: #{classifier_forward.19} parent=1 // pred_check
      _
    $region15: #{classifier_forward.19} parent=1 // pred_check_branch
      %18 = sbr.rel (0) target = $region17
    $region16: #{classifier_forward.19} parent=1 // pred_region
      _
    $region17: #{classifier_forward.19} parent=1 // pred_fallthru
      _
    // Predicated region
    $region18: #{classifier_forward.19} parent=1 // pred_check
      _
    $region19: #{classifier_forward.19} parent=1 // pred_check_branch
      %20 = sbr.rel (0) target = $region21
    $region20: #{classifier_forward.19} parent=1 // pred_region
      _
    $region21: #{classifier_forward.19} parent=1 // pred_fallthru
      _
    %v22 = vld [vmem:[%s0] sm:$0x1]
    %v23 = vld [vmem:[%s1] sm:$0xf]
    %v24 = vld [vmem:[%s1 + $0x4] sm:$0xf]
    %v25 = vld [vmem:[%s1 + $0x8] sm:$0xf]
    %v26 = vld [vmem:[%s1 + $0xc] sm:$0xf]
    %v27 = vld [vmem:[%s2] sm:$0x1]
    %v29 = vperm.slane %v27, 0
    %v35 = vunpack.c.l.b16 %v23
    %v36 = vunpack.c.l.b16 %v24
    %v37 = vunpack.c.l.b16 %v25
    %v38 = vunpack.c.l.b16 %v26
    %v39 = vpack.c.b16 %v36, %v35
    %v40 = vpack.c.b16 %v38, %v37
    %vm43 = vcmask 261120
    %v45 = vsel %vm43, %v22, 0
    %47 = vmatpush.bf16.msra.mxu0 0
    %48 = vmatpush.bf16.msra.mxu0 0
    %49 = vmatpush.bf16.msra.mxu0 0
    %50 = vmatpush.bf16.msra.mxu0 0
    %51 = vmatpush.bf16.msra.mxu0 0
    %52 = vmatpush.bf16.msra.mxu0 0
    %53 = vmatpush.bf16.msra.mxu0 %v40
    %54 = vmatpush.bf16.msra.mxu0 %v39
    %55 = vmatmul.bf16.gmra.mxu0 %v45
    %v56 = vpop.f32.mrf.mxu0
    %v57 = vadd.f32 %v29, %v56
    %v58 = vpop.f32.mrf.mxu0
    %59 = vdwg.mxu0
    %v60 = vtanh.pop %v57
    %v61 = vpack.c.bf16 %v60, %v60
    %v62 = vld [vmem:[%s3] sm:$0xf]
    %v63 = vld [vmem:[%s3 + $0x4] sm:$0xf]
    %v64 = vld [vmem:[%s3 + $0x8] sm:$0xf]
    %v65 = vld [vmem:[%s3 + $0xc] sm:$0xf]
    %v66 = vld [vmem:[%s4] sm:$0x1]
    %v68 = vperm.slane %v66, 0
    %v74 = vunpack.c.l.b16 %v62
    %v75 = vunpack.c.l.b16 %v63
    %v76 = vunpack.c.l.b16 %v64
    %v77 = vunpack.c.l.b16 %v65
    %v78 = vpack.c.b16 %v75, %v74
    %v79 = vpack.c.b16 %v77, %v76
    %v83 = vsel %vm43, %v61, 0
    %85 = vmatpush.bf16.msra.mxu0 0
    %86 = vmatpush.bf16.msra.mxu0 0
    %87 = vmatpush.bf16.msra.mxu0 0
    %88 = vmatpush.bf16.msra.mxu0 0
    %89 = vmatpush.bf16.msra.mxu0 0
    %90 = vmatpush.bf16.msra.mxu0 0
    %91 = vmatpush.bf16.msra.mxu0 %v79
    %92 = vmatpush.bf16.msra.mxu0 %v78
    %93 = vmatmul.bf16.gmra.mxu0 %v83
    %v94 = vpop.f32.mrf.mxu0
    %v95 = vadd.f32 %v68, %v94
    %v96 = vpop.f32.mrf.mxu0
    %97 = vdwg.mxu0
    %vm98 = vcmask 41984
    %99 = vst.msk [vmem:[#allocation2] sm:$0x3] %vm98, %v95
    // Predicated region
    $region22: #{classifier_forward.19} parent=1 // pred_check
      _
    $region23: #{classifier_forward.19} parent=1 // pred_check_branch
      %101 = sbr.rel (0) target = $region25
    $region24: #{classifier_forward.19} parent=1 // pred_region
      %103 = vsyncadd [#allocation3], 0
      %s105 = sshll.u32 [#allocation2], 4
      %s106 = int_to_ptr.vmem [resolvable:$true] %s105
      %s107 = sshll.u32 %s5, 4
      %s108 = int_to_ptr.hbm [resolvable:$true] %s107
      %110 = dma.vmem_to_hbm [thread:$0]  %s106, 32, %s108, [#allocation3]
    $region25: #{classifier_forward.19} parent=1 // pred_fallthru
      _
    // Predicated region
    $region26: #{classifier_forward.19} parent=1 // pred_check
      _
    $region27: #{classifier_forward.19} parent=1 // pred_check_branch
      %112 = sbr.rel (0) target = $region29
    $region28: #{classifier_forward.19} parent=1 // pred_region
      %114 = dma.done [#allocation3], 32
    $region29: #{classifier_forward.19} parent=1 // pred_fallthru
      _
    %115 = vsyncpa [#allocation3], 1

// kernel: classifier_forward.14
$region0: #{classifier_forward.14}
  #allocation0 [shape = 'u32[]', space=smem, size = 0x4, offset = 0x4, fixed_abs, tag = 'smem constant byte address 0x4 - core index']
  #allocation1 [shape = 'u32[72,128]{1,0:T(1,128)}', space=vmem, size = 0x9000, scoped, tag = 'internal scratch']
  %s0 = inlined_call_operand.vmem [shape: bf16[16,32], index: 0, kind: input, shape index: {}]
  %s1 = inlined_call_operand.vmem [shape: bf16[32,64], index: 1, kind: input, shape index: {}]
  %s2 = inlined_call_operand.vmem [shape: f32[1,64], index: 2, kind: input, shape index: {}]
  %s3 = inlined_call_operand.vmem [shape: bf16[64,32], index: 3, kind: input, shape index: {}]
  %s4 = inlined_call_operand.vmem [shape: f32[1,32], index: 4, kind: input, shape index: {}]
  %s5 = inlined_call_operand.vmem [shape: f32[1,32], index: 5, kind: input, shape index: {}]
  %s6 = inlined_call_operand.vmem [shape: f32[1,32], index: 6, kind: input, shape index: {}]
  %s7 = inlined_call_operand.vmem [shape: bf16[16,32], index: 7, kind: output, shape index: {}]
  %s8 = sld [smem:[#allocation0]]
  $region38: #{classifier_forward.14} parent=0
    _
  %s10 = ssub.s32 1, %s8
  %s11 = scalar_select 0, %s10, %s8
  // Predicated region
  $region2: #{classifier_forward.14} parent=0 // pred_check
    _
  $region3: #{classifier_forward.14} parent=0 // pred_check_branch
    %13 = sbr.rel (0) target = $region5
  $region4: #{classifier_forward.14} parent=0 // pred_region
    _
  $region5: #{classifier_forward.14} parent=0 // pred_fallthru
    _
  // Predicated region
  $region6: #{classifier_forward.14} parent=0 // pred_check
    _
  $region7: #{classifier_forward.14} parent=0 // pred_check_branch
    %15 = sbr.rel (0) target = $region9
  $region8: #{classifier_forward.14} parent=0 // pred_region
    _
  $region9: #{classifier_forward.14} parent=0 // pred_fallthru
    _
  // Predicated region
  $region10: #{classifier_forward.14} parent=0 // pred_check
    _
  $region11: #{classifier_forward.14} parent=0 // pred_check_branch
    %17 = sbr.rel (0) target = $region13
  $region12: #{classifier_forward.14} parent=0 // pred_region
    _
  $region13: #{classifier_forward.14} parent=0 // pred_fallthru
    _
  // Predicated region
  $region14: #{classifier_forward.14} parent=0 // pred_check
    _
  $region15: #{classifier_forward.14} parent=0 // pred_check_branch
    %19 = sbr.rel (0) target = $region17
  $region16: #{classifier_forward.14} parent=0 // pred_region
    _
  $region17: #{classifier_forward.14} parent=0 // pred_fallthru
    _
  // Predicated region
  $region18: #{classifier_forward.14} parent=0 // pred_check
    _
  $region19: #{classifier_forward.14} parent=0 // pred_check_branch
    %21 = sbr.rel (0) target = $region21
  $region20: #{classifier_forward.14} parent=0 // pred_region
    _
  $region21: #{classifier_forward.14} parent=0 // pred_fallthru
    _
  // Predicated region
  $region22: #{classifier_forward.14} parent=0 // pred_check
    _
  $region23: #{classifier_forward.14} parent=0 // pred_check_branch
    %23 = sbr.rel (0) target = $region25
  $region24: #{classifier_forward.14} parent=0 // pred_region
    _
  $region25: #{classifier_forward.14} parent=0 // pred_fallthru
    _
  // Predicated region
  $region26: #{classifier_forward.14} parent=0 // pred_check
    _
  $region27: #{classifier_forward.14} parent=0 // pred_check_branch
    %25 = sbr.rel (0) target = $region29
  $region28: #{classifier_forward.14} parent=0 // pred_region
    _
  $region29: #{classifier_forward.14} parent=0 // pred_fallthru
    _
  %v27 = vld [vmem:[%s0] sm:$0xf]
  %v28 = vld [vmem:[%s0 + $0x4] sm:$0xf]
  %v29 = vld [vmem:[%s1] sm:$0xf]
  %v30 = vld [vmem:[%s1 + $0x4] sm:$0xf]
  %v31 = vld [vmem:[%s1 + $0x8] sm:$0xf]
  %v32 = vld [vmem:[%s1 + $0xc] sm:$0xf]
  %v33 = vld [vmem:[%s2] sm:$0x1]
  %v35 = vperm.slane %v33, 0
  %v39 = vunpack.c.l.b16 %v27
  %v40 = vunpack.c.l.b16 %v28
  %v41 = vpack.c.b16 %v40, %v39
  %v46 = vunpack.c.l.b16 %v29
  %v47 = vunpack.c.l.b16 %v30
  %v48 = vunpack.c.l.b16 %v31
  %v49 = vunpack.c.l.b16 %v32
  %v50 = vpack.c.b16 %v47, %v46
  %v51 = vpack.c.b16 %v49, %v48
  %vm54 = vcmask 261120
  %v56 = vsel %vm54, %v41, 0
  %58 = vmatpush.bf16.msra.mxu0 0
  %59 = vmatpush.bf16.msra.mxu0 0
  %60 = vmatpush.bf16.msra.mxu0 0
  %61 = vmatpush.bf16.msra.mxu0 0
  %62 = vmatpush.bf16.msra.mxu0 0
  %63 = vmatpush.bf16.msra.mxu0 0
  %64 = vmatpush.bf16.msra.mxu0 %v51
  %65 = vmatpush.bf16.msra.mxu0 %v50
  %66 = vmatmul.bf16.gmra.mxu0 %v56
  %v67 = vpop.f32.mrf.mxu0
  %v68 = vadd.f32 %v35, %v67
  %v69 = vpop.f32.mrf.mxu0
  %v70 = vadd.f32 %v35, %v69
  %71 = vdwg.mxu0
  %v72 = vmul.f32 %v68, 0.5
  %v73 = vmul.f32 %v70, 0.5
  %v74 = vmul.f32 %v68, 0.70710677
  %v75 = vmul.f32 %v70, 0.70710677
  %v76 = vmul.f32 %v74, %v74
  %v77 = vmin.f32 16.0, %v76
  %v78 = vmul.f32 %v77, 2.1237322e-06
  %v79 = vadd.f32 %v78, 0.00028619796
  %v80 = vmul.f32 %v77, %v79
  %v81 = vadd.f32 %v80, 0.0036580483
  %v82 = vmul.f32 %v77, %v81
  %v83 = vadd.f32 %v82, 0.05243302
  %v84 = vmul.f32 %v77, %v83
  %v85 = vadd.f32 %v84, 0.18741608
  %v86 = vmul.f32 %v77, %v85
  %v87 = vadd.f32 %v86, 1.1283791
  %v88 = vmul.f32 %v74, %v87
  %v89 = vmul.f32 %v77, 3.8918573e-05
  %v90 = vadd.f32 %v89, 0.001143296
  %v91 = vmul.f32 %v77, %v90
  %v92 = vadd.f32 %v91, 0.014752088
  %v93 = vmul.f32 %v77, %v92
  %v94 = vadd.f32 %v93, 0.112945676
  %v95 = vmul.f32 %v77, %v94
  %v96 = vadd.f32 %v95, 0.4994258
  %v97 = vmul.f32 %v77, %v96
  %v98 = vadd.f32 %v97, 1.0
  %v99 = vrcp.pop %v98
  %v100 = vmul.f32 %v98, %v99
  %v101 = vsub.f32 1.0, %v100
  %v102 = vmul.f32 %v99, %v101
  %v103 = vadd.f32 %v99, %v102
  %vm104 = vweird.f32 %v98
  %vm105 = vweird.f32 %v99
  %vm106 = vmor %vm104, %vm105
  %v107 = vsel %vm106, %v99, %v103
  %v108 = vand.u32 2147483647, %v98
  %vm109 = vcmp.eq.f32.partialorder %v108, 8.507059e+37
  %v110 = vand.u32 %v98, 2147483648
  %v111 = vor.u32 1.1754944e-38, %v110
  %v112 = vsel %vm109, %v111, %v107
  %v113 = vmul.f32 %v88, %v112
  %v114 = vmin.f32 %v113, 1.0
  %v115 = vmax.f32 %v114, -1.0
  %v116 = vmul.f32 %v75, %v75
  %v117 = vmin.f32 16.0, %v116
  %v118 = vmul.f32 %v117, 2.1237322e-06
  %v119 = vadd.f32 %v118, 0.00028619796
  %v120 = vmul.f32 %v117, %v119
  %v121 = vadd.f32 %v120, 0.0036580483
  %v122 = vmul.f32 %v117, %v121
  %v123 = vadd.f32 %v122, 0.05243302
  %v124 = vmul.f32 %v117, %v123
  %v125 = vadd.f32 %v124, 0.18741608
  %v126 = vmul.f32 %v117, %v125
  %v127 = vadd.f32 %v126, 1.1283791
  %v128 = vmul.f32 %v75, %v127
  %v129 = vmul.f32 %v117, 3.8918573e-05
  %v130 = vadd.f32 %v129, 0.001143296
  %v131 = vmul.f32 %v117, %v130
  %v132 = vadd.f32 %v131, 0.014752088
  %v133 = vmul.f32 %v117, %v132
  %v134 = vadd.f32 %v133, 0.112945676
  %v135 = vmul.f32 %v117, %v134
  %v136 = vadd.f32 %v135, 0.4994258
  %v137 = vmul.f32 %v117, %v136
  %v138 = vadd.f32 %v137, 1.0
  %v139 = vrcp.pop %v138
  %v140 = vmul.f32 %v138, %v139
  %v141 = vsub.f32 1.0, %v140
  %v142 = vmul.f32 %v139, %v141
  %v143 = vadd.f32 %v139, %v142
  %vm144 = vweird.f32 %v138
  %vm145 = vweird.f32 %v139
  %vm146 = vmor %vm144, %vm145
  %v147 = vsel %vm146, %v139, %v143
  %v148 = vand.u32 2147483647, %v138
  %vm149 = vcmp.eq.f32.partialorder %v148, 8.507059e+37
  %v150 = vand.u32 %v138, 2147483648
  %v151 = vor.u32 1.1754944e-38, %v150
  %v152 = vsel %vm149, %v151, %v147
  %v153 = vmul.f32 %v128, %v152
  %v154 = vmin.f32 %v153, 1.0
  %v155 = vmax.f32 %v154, -1.0
  %v156 = vadd.f32 %v115, 1.0
  %v157 = vadd.f32 %v155, 1.0
  %v158 = vmul.f32 %v72, %v156
  %v159 = vmul.f32 %v73, %v157
  %v160 = vpack.c.bf16 %v159, %v158
  %v161 = vld [vmem:[%s3] sm:$0xf]
  %v162 = vld [vmem:[%s3 + $0x4] sm:$0xf]
  %v163 = vld [vmem:[%s3 + $0x8] sm:$0xf]
  %v164 = vld [vmem:[%s3 + $0xc] sm:$0xf]
  %v165 = vld [vmem:[%s3 + $0x10] sm:$0xf]
  %v166 = vld [vmem:[%s3 + $0x14] sm:$0xf]
  %v167 = vld [vmem:[%s3 + $0x18] sm:$0xf]
  %v168 = vld [vmem:[%s3 + $0x1c] sm:$0xf]
  %v169 = vld [vmem:[%s4] sm:$0x1]
  %v171 = vperm.slane %v169, 0
  %v181 = vunpack.c.l.b16 %v161
  %v182 = vunpack.c.l.b16 %v162
  %v183 = vunpack.c.l.b16 %v163
  %v184 = vunpack.c.l.b16 %v164
  %v185 = vunpack.c.l.b16 %v165
  %v186 = vunpack.c.l.b16 %v166
  %v187 = vunpack.c.l.b16 %v167
  %v188 = vunpack.c.l.b16 %v168
  %v189 = vpack.c.b16 %v182, %v181
  %v190 = vpack.c.b16 %v184, %v183
  %v191 = vpack.c.b16 %v186, %v185
  %v192 = vpack.c.b16 %v188, %v187
  %vm197 = vcmask 523264
  %v199 = vsel %vm197, %v160, 0
  %201 = vmatpush.bf16.msra.mxu0 0
  %202 = vmatpush.bf16.msra.mxu0 0
  %203 = vmatpush.bf16.msra.mxu0 0
  %204 = vmatpush.bf16.msra.mxu0 0
  %205 = vmatpush.bf16.msra.mxu0 %v192
  %206 = vmatpush.bf16.msra.mxu0 %v191
  %207 = vmatpush.bf16.msra.mxu0 %v190
  %208 = vmatpush.bf16.msra.mxu0 %v189
  %209 = vmatmul.bf16.gmra.mxu0 %v199
  %v210 = vpop.f32.mrf.mxu0
  %v211 = vadd.f32 %v171, %v210
  %v212 = vpop.f32.mrf.mxu0
  %v213 = vadd.f32 %v171, %v212
  %214 = vdwg.mxu0
  %v215 = vunpack.c.l.bf16 %v27
  %v216 = vunpack.c.l.bf16 %v28
  %v217 = vadd.f32 %v211, %v215
  %v218 = vadd.f32 %v213, %v216
  %v219 = vsel %vm54, %v217, 0.0
  %220 = vadd.xlane.f32.xlu0 %v219
  %v221 = vpop.xlane.xlu0 %220
  %v222 = vsel %vm54, %v218, 0.0
  %223 = vadd.xlane.f32.xlu0 %v222
  %v224 = vpop.xlane.xlu0 %223
  %v225 = vrcp.pop 32.0
  %v226 = vmul.f32 32.0, %v225
  %v227 = vsub.f32 1.0, %v226
  %v228 = vmul.f32 %v225, %v227
  %v229 = vadd.f32 %v225, %v228
  %vm230 = vweird.f32 %v225
  %v231 = vsel %vm230, %v225, %v229
  %v232 = vmul.f32 %v221, %v231
  %v233 = vmul.f32 %v224, %v231
  %v234 = vsub.f32 %v217, %v232
  %v235 = vsub.f32 %v218, %v233
  %v236 = vmul.f32 %v234, %v234
  %v237 = vmul.f32 %v235, %v235
  %v238 = vsel %vm54, %v236, 0.0
  %239 = vadd.xlane.f32.xlu0 %v238
  %v240 = vpop.xlane.xlu0 %239
  %v241 = vsel %vm54, %v237, 0.0
  %242 = vadd.xlane.f32.xlu0 %v241
  %v243 = vpop.xlane.xlu0 %242
  %v244 = vmul.f32 %v240, %v231
  %v245 = vmul.f32 %v243, %v231
  %v246 = vadd.f32 %v244, 1e-12
  %v247 = vadd.f32 %v245, 1e-12
  %v248 = vrsqrt.pop %v246
  %v249 = vmul.f32 %v248, %v246
  %v250 = vmul.f32 %v249, %v248
  %v251 = vmul.f32 0.5, %v250
  %v252 = vsub.f32 1.5, %v251
  %v253 = vmul.f32 %v248, %v252
  %vm254 = vweird.f32 %v246
  %vm255 = vweird.f32 %v248
  %vm256 = vmor %vm254, %vm255
  %v257 = vsel %vm256, %v248, %v253
  %v258 = vrsqrt.pop %v247
  %v259 = vmul.f32 %v258, %v247
  %v260 = vmul.f32 %v259, %v258
  %v261 = vmul.f32 0.5, %v260
  %v262 = vsub.f32 1.5, %v261
  %v263 = vmul.f32 %v258, %v262
  %vm264 = vweird.f32 %v247
  %vm265 = vweird.f32 %v258
  %vm266 = vmor %vm264, %vm265
  %v267 = vsel %vm266, %v258, %v263
  %v268 = vmul.f32 %v234, %v257
  %v269 = vmul.f32 %v235, %v267
  %v270 = vld [vmem:[%s5] sm:$0x1]
  %v272 = vperm.slane %v270, 0
  %v274 = vmul.f32 %v268, %v272
  %v275 = vmul.f32 %v269, %v272
  %v276 = vld [vmem:[%s6] sm:$0x1]
  %v278 = vperm.slane %v276, 0
  %v280 = vadd.f32 %v274, %v278
  %v281 = vadd.f32 %v275, %v278
  %v282 = vpack.c.bf16 %v280, %v280
  %v283 = vpack.c.bf16 %v281, %v281
  %vm284 = vcmask 257024
  %285 = vst.msk [vmem:[%s7] sm:$0xf] %vm284, %v282
  %286 = vst.msk [vmem:[%s7 + $0x4] sm:$0xf] %vm284, %v283
  // Predicated region
  $region30: #{classifier_forward.14} parent=0 // pred_check
    _
  $region31: #{classifier_forward.14} parent=0 // pred_check_branch
    %288 = sbr.rel (0) target = $region33
  $region32: #{classifier_forward.14} parent=0 // pred_region
    _
  $region33: #{classifier_forward.14} parent=0 // pred_fallthru
    _
  // Predicated region
  $region34: #{classifier_forward.14} parent=0 // pred_check
    _
  $region35: #{classifier_forward.14} parent=0 // pred_check_branch
    %290 = sbr.rel (0) target = $region37
  $region36: #{classifier_forward.14} parent=0 // pred_region
    _
  $region37: #{classifier_forward.14} parent=0 // pred_fallthru
    _

</llo_original>
